<compile_context>
chip_gen: v7x
topology: tpu7x:2x2x1
jax: 0.10.0
libtpu: 0.0.40
codegen_flags: <defaults>
</compile_context>

<pallas_src>
import functools
import math

import numpy as np

import jax
import jax.numpy as jnp
from jax import lax
from jax.experimental import pallas as pl
from jax.experimental.pallas import tpu as pltpu

LRELU_SLOPE = 0.1
_VMEM_LIMIT = 64 * 1024 * 1024     # explicit scoped-VMEM limit (fits v5e/v6e/v7x physical)
_VMEM_BUDGET = 40 * 1024 * 1024    # activation + weight budget used to pick the T tiles


# -----------------------------------------------------------------------------
# Shared math (used inside the Pallas kernels AND by the pure-JAX reference)
# -----------------------------------------------------------------------------
def _lrelu(x, slope=LRELU_SLOPE):
    return jnp.where(x >= 0, x, x * slope)


def _dot(a, b):
    # bf16 MXU operands, f32 accumulation.
    return jnp.dot(a.astype(jnp.bfloat16), b.astype(jnp.bfloat16),
                   preferred_element_type=jnp.float32)


def _fmod1(x):
    # torch.fmod(x, 1.0): truncation-based remainder (sign follows the dividend).
    return x - jnp.where(x >= 0, jnp.floor(x), -jnp.floor(-x))


def _source_math(f0, corr, noise, wl, bl, *, sr, upp, sine_amp, noise_std, vthresh):
    # SineGen with harmonic_num=0 (dim=1, so rand_ini == 0) + Linear(1,1) + tanh.
    # f0, corr: (T, 1); noise: (T, upp); wl, bl: (1, 1).  Returns (T, upp).
    j = lax.broadcasted_iota(jnp.int32, (1, upp), 1).astype(jnp.float32) + 1.0
    rad = (f0 * (1.0 / sr)) * j + corr
    rad = rad - jnp.floor(rad)              # phase wrap (sin is 1-periodic in rad)
    sine = jnp.sin(2.0 * np.pi * rad) * sine_amp
    uv = (f0 > vthresh).astype(jnp.float32)
    sine = sine * uv + (uv * noise_std + (1.0 - uv) * (sine_amp / 3.0)) * noise
    return jnp.tanh(sine * wl + bl)


def _conv1d_valid(x, w, b, dilation=1):
    # Valid conv, channels-last.  x: (L, Cin), w: (K, Cin, Cout) bf16, b: (1, Cout)|None.
    K = w.shape[0]
    L_out = x.shape[0] - dilation * (K - 1)
    acc = jnp.zeros((L_out, w.shape[2]), jnp.float32)
    for k in range(K):                      # K shifted MXU matmuls (static slice starts)
        acc = acc + _dot(x[k * dilation:k * dilation + L_out, :], w[k])
    if b is not None:
        acc = acc + b
    return acc


def _polyphase_taps(u, K, p):
    # ConvTranspose1d(stride=u, kernel=K, padding=p) expressed as u polyphase convs.
    taps, deltas = [], []
    for r_out in range(u):
        t = []
        for k_ker in range((r_out + p) % u, K, u):
            delta = (r_out + p - k_ker) // u
            t.append((k_ker, delta))
            deltas.append(delta)
        taps.append(tuple(t))
    left = max(0, -min(deltas)) if deltas else 0
    right = max(0, max(deltas)) if deltas else 0
    return tuple(taps), left, right


def _conv_transpose_valid(xf, w, b, *, phase_taps, halo, tile):
    # xf: (tile + 2*halo, Cin) already activated; returns (tile, u*Cout) whose free
    # row-major reshape to (tile*u, Cout) in the wrapper is the interleaved output.
    outs = []
    for taps in phase_taps:
        acc = jnp.zeros((tile, w.shape[2]), jnp.float32) + b
        for k_ker, delta in taps:
            start = halo + delta
            acc = acc + _dot(xf[start:start + tile, :], w[k_ker])
        outs.append(acc)
    return jnp.concatenate(outs, axis=-1)


def _stage_math(xf, winf, wn, bn, rb_w, rb_b, maskF, *,
                dilations, rb_ks, halo, tile, post_w=None):
    # TODO(synk): ResBlock body is not included in the spec; this implements the
    # standard HiFi-GAN / RVC ResBlock (dilated convs1 + dilation-1 convs2, residual).
    extra = 0 if post_w is None else (post_w.shape[0] - 1) // 2
    out_len = tile + 2 * extra
    start = halo - extra                    # frame row of output row 0
    nk = len(rb_ks)

    x = xf + (_dot(winf, wn) + bn)          # upsampled x + noise_conv(har)
    x = x * maskF                           # zero rows outside [0, T): true pad semantics

    acc = jnp.zeros((out_len, x.shape[1]), jnp.float32)
    for r in range(nk):
        kr = rb_ks[r]
        r2 = (kr - 1) // 2
        ws, bs = rb_w[r], rb_b[r]
        xr, off = x, 0
        for j, d in enumerate(dilations[r]):
            r1 = d * (kr - 1) // 2
            xt = _lrelu(xr)
            xt = _conv1d_valid(xt, ws[2 * j], bs[2 * j], dilation=d)
            xt = xt * maskF[off + r1: off + r1 + xt.shape[0]]
            xt = _lrelu(xt)
            xt = _conv1d_valid(xt, ws[2 * j + 1], bs[2 * j + 1], dilation=1)
            sh = r1 + r2
            xt = xt * maskF[off + sh: off + sh + xt.shape[0]]
            xr = xr[sh: xr.shape[0] - sh] + xt
            off += sh
        acc = acc + xr[start - off: start - off + out_len]
    y = acc * (1.0 / nk)                    # static multiply, no divide
    if post_w is None:
        return y
    # fused conv_post: leaky_relu(0.01) + Conv1d(C->1, k=7, bias=False) + tanh
    yp = _lrelu(y, 0.01)
    K = post_w.shape[0]
    accp = jnp.zeros((tile, 1), jnp.float32)
    for k in range(K):
        accp = accp + _dot(yp[k:k + tile, :], post_w[k])
    return jnp.tanh(accp)


# -----------------------------------------------------------------------------
# Pallas kernels
# -----------------------------------------------------------------------------
def _source_kernel(f0_ref, corr_ref, noise_ref, wl_ref, bl_ref, o_ref, *,
                   sr, upp, sine_amp, noise_std, vthresh):
    o_ref[0, 0] = _source_math(f0_ref[0, 0], corr_ref[0, 0], noise_ref[0, 0],
                               wl_ref[...], bl_ref[...],
                               sr=sr, upp=upp, sine_amp=sine_amp,
                               noise_std=noise_std, vthresh=vthresh)


def _conv_pre_kernel(x_ref, cond_ref, w_ref, b_ref, o_ref):
    y = _conv1d_valid(x_ref[0, 0], w_ref[...], b_ref[...], dilation=1)
    o_ref[0, 0] = y + cond_ref[0]           # 1x1 cond(g), broadcast over the tile


def _upsample_kernel(x_ref, w_ref, b_ref, o_ref, *, phase_taps, halo, tile):
    x = _lrelu(x_ref[0, 0])
    o_ref[0, 0] = _conv_transpose_valid(x, w_ref[...], b_ref[...],
                                        phase_taps=phase_taps, halo=halo, tile=tile)


def _stage_kernel(xup_ref, win_ref, *rest,
                  dilations, rb_ks, halo, tile, T_true, fuse_post):
    o_ref = rest[-1]
    w_refs = rest[:-1]
    nk = len(rb_ks)
    wn = w_refs[0][...]
    bn = w_refs[1][...]
    rb_w = [w_refs[2 + 2 * r][...] for r in range(nk)]
    rb_b = [w_refs[3 + 2 * r][...] for r in range(nk)]
    post_w = w_refs[2 + 2 * nk][...] if fuse_post else None

    xf = xup_ref[0, 0]                      # (F, C) upsampled activation frame
    winf = win_ref[0, 0]                    # (F, Kn) noise-conv input windows
    F = xf.shape[0]
    g0 = pl.program_id(1) * tile - halo     # global row of frame row 0
    rows = lax.broadcasted_iota(jnp.int32, (F, 1), 0) + g0
    maskF = ((rows >= 0) & (rows < T_true)).astype(jnp.float32)

    o_ref[0, 0] = _stage_math(xf, winf, wn, bn, rb_w, rb_b, maskF,
                              dilations=dilations, rb_ks=rb_ks,
                              halo=halo, tile=tile, post_w=post_w)


# -----------------------------------------------------------------------------
# pallas_call plumbing
# -----------------------------------------------------------------------------
_WEIGHT_MODE_CACHE = ["unset"]


def _probe_buffered_weights():
    # pl.Buffered(1) on grid-invariant weight blocks halves their VMEM footprint.
    # Probe once (compile + correctness) and fall back silently when unsupported.
    try:
        mode = pl.Buffered(buffer_count=1)
        x = jnp.arange(32 * 128, dtype=jnp.float32).reshape(32, 128)
        w = jnp.ones((8, 128), jnp.float32)

        def k(x_ref, w_ref, o_ref):
            o_ref[...] = x_ref[...] + w_ref[...]

        out = pl.pallas_call(
            k,
            out_shape=jax.ShapeDtypeStruct((32, 128), jnp.float32),
            grid=(4,),
            in_specs=[pl.BlockSpec((8, 128), lambda i: (i, 0)),
                      pl.BlockSpec((8, 128), lambda i: (0, 0), pipeline_mode=mode)],
            out_specs=pl.BlockSpec((8, 128), lambda i: (i, 0)),
        )(x, w)
        if np.allclose(np.asarray(jax.block_until_ready(out)), np.asarray(x) + 1.0):
            return mode
    except Exception:
        pass
    return None


def _weight_mode():
    if _WEIGHT_MODE_CACHE[0] == "unset":
        _WEIGHT_MODE_CACHE[0] = _probe_buffered_weights()
    return _WEIGHT_MODE_CACHE[0]


def _framed_spec(a):
    tail = tuple(a.shape[2:])
    zeros = (0,) * len(tail)
    return pl.BlockSpec((1, 1) + tail, lambda b, t, _z=zeros: (b, t) + _z)


def _batch_spec(a):
    tail = tuple(a.shape[1:])
    zeros = (0,) * len(tail)
    return pl.BlockSpec((1,) + tail, lambda b, t, _z=zeros: (b,) + _z)


def _weight_spec(a, mode):
    shape = tuple(a.shape)
    zeros = (0,) * len(shape)
    if mode is None:
        return pl.BlockSpec(shape, lambda b, t, _z=zeros: _z)
    return pl.BlockSpec(shape, lambda b, t, _z=zeros: _z, pipeline_mode=mode)


def _pcall(kernel, framed, batch, weights, out_tail):
    B, nt = framed[0].shape[0], framed[0].shape[1]
    out_tail = tuple(out_tail)
    out_shape = jax.ShapeDtypeStruct((B, nt) + out_tail, jnp.float32)
    out_zero = (0,) * len(out_tail)
    out_spec = pl.BlockSpec((1, 1) + out_tail, lambda b, t, _z=out_zero: (b, t) + _z)

    def build(mode):
        return pl.pallas_call(
            kernel,
            out_shape=out_shape,
            grid_spec=pltpu.PrefetchScalarGridSpec(
                num_scalar_prefetch=0,
                grid=(B, nt),
                in_specs=([_framed_spec(a) for a in framed]
                          + [_batch_spec(a) for a in batch]
                          + [_weight_spec(w, mode) for w in weights]),
                out_specs=out_spec,
            ),
            compiler_params=pltpu.CompilerParams(
                dimension_semantics=("parallel", "parallel"),
                vmem_limit_bytes=_VMEM_LIMIT),
        )

    mode = _weight_mode()
    if mode is not None:
        try:
            return build(mode)(*framed, *batch, *weights)
        except Exception:
            _WEIGHT_MODE_CACHE[0] = None   # disable single-buffered weights for this run
    return build(None)(*framed, *batch, *weights)


# -----------------------------------------------------------------------------
# Wrapper-level helpers (cheap glue kept in XLA)
# -----------------------------------------------------------------------------
def _nbytes(a):
    return int(np.prod(a.shape)) * a.dtype.itemsize


def _pick_tile(T, halo, row_bytes, weight_bytes=0, max_tile=None):
    # Pick the largest T tile whose live working set fits the VMEM budget.
    avail = max(_VMEM_BUDGET - 2 * weight_bytes, 4 << 20)
    tile = avail // max(int(row_bytes), 1) - 2 * halo
    if max_tile is not None:
        tile = min(tile, max_tile)
    if tile >= T:
        return int(T)
    return int(max(8, (tile // 8) * 8))


def _frame(a, tile, halo):
    # a: (B, T, C) -> overlapping frames (B, nt, tile + 2*halo, C), zero outside [0, T).
    B, T, C = a.shape
    nt = -(-T // tile)
    pad_r = nt * tile - T
    ap = jnp.pad(a, ((0, 0), (halo, halo + pad_r), (0, 0)))
    if halo == 0:
        return ap.reshape(B, nt, tile, C)
    idx = jnp.arange(nt)[:, None] * tile + jnp.arange(tile + 2 * halo)[None, :]
    return jnp.take(ap, idx, axis=1)


def _unframe(o, T):
    B, nt, tile = o.shape[0], o.shape[1], o.shape[2]
    return o.reshape((B, nt * tile) + o.shape[3:])[:, :T]


def _phase_correction(f0, upp, sr):
    # Cross-frame phase continuity term of SineGen._f02sine (sequential O(B*T) cumsum).
    tmp = _fmod1(f0 * (float(upp) / sr) + 0.5) - 0.5            # (B, T)
    corr = _fmod1(jnp.cumsum(tmp[:, :-1], axis=1))
    corr = jnp.pad(corr, ((0, 0), (1, 0)))
    return corr[..., None]                                      # (B, T, 1)


def _noise_windows(har, L, Kn, s, pad_n):
    # Conv1d(1, C, Kn, stride=s, padding=pad_n) input windows: (B, Lh) -> (B, L, Kn).
    B, Lh = har.shape
    need = (L - 1) * s + Kn
    hpad = jnp.pad(har, ((0, 0), (pad_n, max(0, need - Lh - pad_n))))
    idx = jnp.arange(L)[:, None] * s + jnp.arange(Kn)[None, :]
    return jnp.take(hpad, idx, axis=1)


def _stage_radius(rb_ks, dilations):
    # Receptive-field radius of one fused stage (max over parallel resblocks).
    return max(sum((d + 1) * (kr - 1) // 2 for d in dl)
               for kr, dl in zip(rb_ks, dilations))


# -----------------------------------------------------------------------------
# Full GeneratorNSF forward (Pallas) and pure-JAX reference
# -----------------------------------------------------------------------------
def generator_nsf_forward_pallas(x, f0, g, noise, params, cfg):
    """x: (B, T0, initial_ch) NLC; f0: (B, T0); g: (B, gin, 1); noise: (B, T0, upp)."""
    B, T0, cin0 = x.shape
    rates = cfg["upsample_rates"]
    ksizes = cfg["upsample_kernel_sizes"]
    rb_ks = tuple(cfg["resblock_kernel_sizes"])
    dils = tuple(tuple(d) for d in cfg["resblock_dilation_sizes"])
    upp = math.prod(rates)
    sr = cfg["sr"]
    nk = len(rb_ks)
    mt = cfg.get("max_tile")

    # --- SourceModuleHnNSF -----------------------------------------------------
    corr = _phase_correction(f0, upp, sr)
    t_tile = _pick_tile(T0, 0, 4 * (4 * upp + 8), 0, mt)
    src_k = functools.partial(_source_kernel, sr=sr, upp=upp,
                              sine_amp=0.1, noise_std=0.003, vthresh=0.0)
    har = _pcall(src_k,
                 [_frame(f0[..., None], t_tile, 0), _frame(corr, t_tile, 0),
                  _frame(noise, t_tile, 0)],
                 [], [params["l_w"], params["l_b"]], (t_tile, upp))
    har = _unframe(har, T0).reshape(B, T0 * upp)                # (B, Lh)

    # --- conv_pre (+ cond(g)) ----------------------------------------------------
    c0 = params["pre_w"].shape[2]
    # 1x1 cond conv over the single (B, gin, 1) vector: trivial, kept in the wrapper.
    cond = jnp.einsum("bgi,gc->bic", g, params["cond_w"]) + params["cond_b"][None]
    h_pre = (params["pre_w"].shape[0] - 1) // 2
    p_tile = _pick_tile(T0, h_pre, 4 * (2 * cin0 + 4 * c0), _nbytes(params["pre_w"]), mt)
    xk = _pcall(_conv_pre_kernel, [_frame(x, p_tile, h_pre)], [cond],
                [params["pre_w"], params["pre_b"]], (p_tile, c0))
    xk = _unframe(xk, T0)

    # --- upsample stages ---------------------------------------------------------
    T = T0
    radius = _stage_radius(rb_ks, dils)
    for i, (u, k) in enumerate(zip(rates, ksizes)):
        st = params["stages"][i]
        # TODO(synk): odd upsample rates (output_padding=1) / odd (k-u) are not handled
        # by the polyphase formulation; stock RVC configs are all even.
        assert u % 2 == 0 and (k - u) % 2 == 0
        p = (k - u) // 2
        taps, left, right = _polyphase_taps(u, k, p)
        h_up = max(left, right)
        cin_i = xk.shape[-1]
        cout = st["up_w"].shape[2]

        u_tile = _pick_tile(T, h_up, 4 * (2 * cin_i + 3 * u * cout),
                            _nbytes(st["up_w"]), mt)
        up_k = functools.partial(_upsample_kernel, phase_taps=taps,
                                 halo=h_up, tile=u_tile)
        y = _pcall(up_k, [_frame(xk, u_tile, h_up)], [],
                   [st["up_w"], st["up_b"]], (u_tile, u * cout))
        y = _unframe(y, T)
        T = T * u
        xk = y.reshape(B, T, cout)          # free row-major interleave of the u phases

        last = (i == len(rates) - 1)
        extra = (params["post_w"].shape[0] - 1) // 2 if last else 0
        H = radius + extra
        s = st["stride"]
        Kn = st["noise_w"].shape[0]
        win = _noise_windows(har, T, Kn, s, st["pad_n"])        # (B, T, Kn) lane-dense

        weights = [st["noise_w"], st["noise_b"]]
        for r in range(nk):
            weights += [st["rb_w"][r], st["rb_b"][r]]
        if last:
            weights.append(params["post_w"])
        wbytes = sum(_nbytes(w) for w in weights)
        s_tile = _pick_tile(T, H, 4 * (10 * cout + 2 * Kn), wbytes, mt)

        st_k = functools.partial(_stage_kernel, dilations=dils, rb_ks=rb_ks,
                                 halo=H, tile=s_tile, T_true=T, fuse_post=last)
        out_c = 1 if last else cout
        xk = _pcall(st_k, [_frame(xk, s_tile, H), _frame(win, s_tile, H)], [],
                    weights, (s_tile, out_c))
        xk = _unframe(xk, T)
    return xk                               # (B, T0*upp, 1)


# ------------------------- pure-JAX reference (non-tiled) ---------------------
def _conv1d_same(x, w, b, dilation=1):
    L, cin = x.shape
    K = w.shape[0]
    pad = dilation * (K - 1) // 2
    if pad:
        z = jnp.zeros((pad, cin), x.dtype)
        xp = jnp.concatenate([z, x, z], axis=0)
    else:
        xp = x
    acc = jnp.zeros((L, w.shape[2]), jnp.float32)
    for k in range(K):
        acc = acc + _dot(xp[k * dilation:k * dilation + L, :], w[k])
    if b is not None:
        acc = acc + b
    return acc


def _conv_transpose_same(x, w, b, *, phase_taps, left, right):
    T, cin = x.shape
    parts = []
    if left:
        parts.append(jnp.zeros((left, cin), x.dtype))
    parts.append(x)
    if right:
        parts.append(jnp.zeros((right, cin), x.dtype))
    xp = jnp.concatenate(parts, axis=0) if len(parts) > 1 else x
    outs = []
    for taps in phase_taps:
        acc = jnp.zeros((T, w.shape[2]), jnp.float32) + b
        for k_ker, delta in taps:
            acc = acc + _dot(xp[left + delta:left + delta + T, :], w[k_ker])
        outs.append(acc)
    return jnp.concatenate(outs, axis=-1)


def _resblock_ref(x, ws, bs, kr, dils_r):
    xr = x
    for j, d in enumerate(dils_r):
        xt = _lrelu(xr)
        xt = _conv1d_same(xt, ws[2 * j], bs[2 * j], dilation=d)
        xt = _lrelu(xt)
        xt = _conv1d_same(xt, ws[2 * j + 1], bs[2 * j + 1], dilation=1)
        xr = xr + xt
    return xr


def _post_ref(x, w_post):
    y = _lrelu(x, 0.01)
    L, C = y.shape
    K = w_post.shape[0]
    pad = (K - 1) // 2
    z = jnp.zeros((pad, C), y.dtype)
    yp = jnp.concatenate([z, y, z], axis=0)
    acc = jnp.zeros((L, 1), jnp.float32)
    for k in range(K):
        acc = acc + _dot(yp[k:k + L, :], w_post[k])
    return jnp.tanh(acc)


def generator_nsf_forward_ref(x, f0, g, noise, params, cfg):
    B, T0, _ = x.shape
    rates = cfg["upsample_rates"]
    ksizes = cfg["upsample_kernel_sizes"]
    rb_ks = tuple(cfg["resblock_kernel_sizes"])
    dils = tuple(tuple(d) for d in cfg["resblock_dilation_sizes"])
    upp = math.prod(rates)
    sr = cfg["sr"]
    nk = len(rb_ks)
    corr = _phase_correction(f0, upp, sr)
    cond = jnp.einsum("bgi,gc->bic", g, params["cond_w"]) + params["cond_b"][None]

    outs = []
    for b in range(B):
        har = _source_math(f0[b][:, None], corr[b], noise[b],
                           params["l_w"], params["l_b"],
                           sr=sr, upp=upp, sine_amp=0.1, noise_std=0.003, vthresh=0.0)
        har = har.reshape(1, T0 * upp)
        xb = _conv1d_same(x[b], params["pre_w"], params["pre_b"], 1) + cond[b]
        T = T0
        for i, (u, k) in enumerate(zip(rates, ksizes)):
            st = params["stages"][i]
            p = (k - u) // 2
            taps, left, right = _polyphase_taps(u, k, p)
            cout = st["up_w"].shape[2]
            y = _conv_transpose_same(_lrelu(xb), st["up_w"], st["up_b"],
                                     phase_taps=taps, left=left, right=right)
            T = T * u
            xb = y.reshape(T, cout)
            s = st["stride"]
            Kn = st["noise_w"].shape[0]
            win = _noise_windows(har, T, Kn, s, st["pad_n"])[0]
            xb = xb + (_dot(win, st["noise_w"]) + st["noise_b"])
            acc = jnp.zeros_like(xb)
            for r in range(nk):
                acc = acc + _resblock_ref(xb, st["rb_w"][r], st["rb_b"][r],
                                          rb_ks[r], dils[r])
            xb = acc * (1.0 / nk)
        outs.append(_post_ref(xb, params["post_w"]))
    return jnp.stack(outs, axis=0)


# -----------------------------------------------------------------------------
# Parameter init (kernel-ready layouts; conv weights (K, Cin, Cout) in bfloat16)
# -----------------------------------------------------------------------------
def init_generator_params(key, cfg):
    c0 = cfg["upsample_initial_channel"]
    cin0 = cfg["initial_channel"]
    gin = cfg["gin_channels"]
    rates = cfg["upsample_rates"]
    ksizes = cfg["upsample_kernel_sizes"]
    rb_ks = cfg["resblock_kernel_sizes"]
    rb_ds = cfg["resblock_dilation_sizes"]
    n_up = len(rates)
    channels = [c0 // (2 ** (i + 1)) for i in range(n_up)]
    stride_f0s = [math.prod(rates[i + 1:]) if i + 1 < n_up else 1 for i in range(n_up)]

    keys = iter(jax.random.split(key, 256))

    def nrm(shape, s=0.1, dtype=jnp.float32):
        return (jax.random.normal(next(keys), shape, jnp.float32) * s).astype(dtype)

    params = dict(
        l_w=nrm((1, 1), 1.0),
        l_b=nrm((1, 1), 0.1),
        pre_w=nrm((7, cin0, c0), 0.1, jnp.bfloat16),
        pre_b=nrm((1, c0), 0.05),
        cond_w=nrm((gin, c0)),
        cond_b=nrm((1, c0), 0.05),
        post_w=nrm((7, channels[-1], 1), 0.1, jnp.bfloat16),
        stages=[],
    )
    cin = c0
    for i, (u, k) in enumerate(zip(rates, ksizes)):
        cout = channels[i]
        s = stride_f0s[i]
        kn = 1 if s == 1 else s * 2 - s % 2
        pn = 0 if s == 1 else (kn - s) // 2
        rb_w, rb_b = [], []
        for kr, dl in zip(rb_ks, rb_ds):
            nconv = 2 * len(dl)                                # conv1 + conv2 per dilation
            rb_w.append(nrm((nconv, kr, cout, cout), 0.1, jnp.bfloat16))
            rb_b.append(nrm((nconv, 1, cout), 0.05))
        params["stages"].append(dict(
            up_w=nrm((k, cin, cout), 0.1, jnp.bfloat16),
            up_b=nrm((1, cout), 0.05),
            noise_w=nrm((kn, cout), 0.1, jnp.bfloat16),
            noise_b=nrm((1, cout), 0.05),
            stride=s, pad_n=pn,
            rb_w=rb_w, rb_b=rb_b,
        ))
        cin = cout
    return params


# -----------------------------------------------------------------------------
if __name__ == "__main__":
    cfg = dict(
        initial_channel=16,
        resblock_kernel_sizes=[3, 5],
        resblock_dilation_sizes=[[1, 3], [1, 3]],
        upsample_rates=[2, 2],
        upsample_initial_channel=32,
        upsample_kernel_sizes=[4, 4],
        gin_channels=8,
        sr=16000,
        max_tile=32,     # small cap so the toy run exercises multi-tile framing + halos
    )
    B, T0 = 2, 24
    upp = math.prod(cfg["upsample_rates"])

    key = jax.random.PRNGKey(0)
    kx, kf1, kf2, kg, kn, kp = jax.random.split(key, 6)

    x = jax.random.normal(kx, (B, T0, cfg["initial_channel"]), jnp.float32)
    # f0 with some unvoiced (zero) frames
    f0 = jnp.where(jax.random.uniform(kf1, (B, T0)) < 0.25, 0.0,
                   100.0 + 200.0 * jax.random.uniform(kf2, (B, T0)))
    g = jax.random.normal(kg, (B, cfg["gin_channels"], 1), jnp.float32)
    # torch.randn_like noise of SineGen passed in explicitly so the run is deterministic
    noise = jax.random.normal(kn, (B, T0, upp), jnp.float32)

    params = init_generator_params(kp, cfg)

    out = generator_nsf_forward_pallas(x, f0, g, noise, params, cfg)
    out = jax.block_until_ready(out)
    assert out.shape == (B, T0 * upp, 1)

    ref = generator_nsf_forward_ref(x, f0, g, noise, params, cfg)
    np.testing.assert_allclose(np.asarray(out), np.asarray(ref), atol=2e-2, rtol=2e-2)
    print("KERNEL_OK")
</pallas_src>

<mosaic_0001>
module attributes {stable_mosaic.version = 11 : i64} {
  func.func @k(%arg0: i32, %arg1: memref<8x128xf32, #tpu.memory_space<vmem>>, %arg2: memref<8x128xf32, #tpu.memory_space<vmem>>, %arg3: memref<8x128xf32, #tpu.memory_space<vmem>>) attributes {dimension_semantics = [#tpu.dimension_semantics<arbitrary>], iteration_bounds = array<i64: 4>, scalar_prefetch = 0 : i64, scratch_operands = 0 : i64, tpu.core_type = #tpu.core_type<tc>, window_params = [{transform_indices = @transform_0, window_bounds = array<i64: 8, 128>}, {pipeline_mode = #tpu.pipeline_mode<synchronous>, transform_indices = @transform_1, window_bounds = array<i64: 8, 128>}, {transform_indices = @transform_2, window_bounds = array<i64: 8, 128>}]} {
    %c0 = arith.constant 0 : index
    %c0_0 = arith.constant 0 : index
    %0 = vector.load %arg1[%c0, %c0_0] : memref<8x128xf32, #tpu.memory_space<vmem>>, vector<8x128xf32>
    %c0_1 = arith.constant 0 : index
    %c0_2 = arith.constant 0 : index
    %1 = vector.load %arg2[%c0_1, %c0_2] : memref<8x128xf32, #tpu.memory_space<vmem>>, vector<8x128xf32>
    %2 = arith.addf %0, %1 : vector<8x128xf32>
    %c0_3 = arith.constant 0 : index
    %c0_4 = arith.constant 0 : index
    %3 = vector.load %arg3[%c0_3, %c0_4] : memref<8x128xf32, #tpu.memory_space<vmem>>, vector<8x128xf32>
    tpu.vector_store %arg3[%c0_3, %c0_4], %2 {strides = array<i32>} : memref<8x128xf32, #tpu.memory_space<vmem>>, vector<8x128xf32>,
    return
  }
  func.func @transform_0(%arg0: i32) -> (i32, i32) {
    %c0_i32 = arith.constant 0 : i32
    %c0_i32_0 = arith.constant 0 : i32
    return %arg0, %c0_i32 : i32, i32
  }
  func.func @transform_1(%arg0: i32) -> (i32, i32) {
    %c0_i32 = arith.constant 0 : i32
    %c0_i32_0 = arith.constant 0 : i32
    %c0_i32_1 = arith.constant 0 : i32
    return %c0_i32, %c0_i32_0 : i32, i32
  }
  func.func @transform_2(%arg0: i32) -> (i32, i32) {
    %c0_i32 = arith.constant 0 : i32
    %c0_i32_0 = arith.constant 0 : i32
    return %arg0, %c0_i32 : i32, i32
  }
}

module attributes {stable_mosaic.version = 11 : i64} {
  func.func @_source_kernel(%arg0: i32, %arg1: i32, %arg2: memref<1x1x24x1xf32, #tpu.memory_space<vmem>>, %arg3: memref<1x1x24x1xf32, #tpu.memory_space<vmem>>, %arg4: memref<1x1x24x4xf32, #tpu.memory_space<vmem>>, %arg5: memref<1x1xf32, #tpu.memory_space<vmem>>, %arg6: memref<1x1xf32, #tpu.memory_space<vmem>>, %arg7: memref<1x1x24x4xf32, #tpu.memory_space<vmem>>) attributes {dimension_semantics = [#tpu.dimension_semantics<parallel>, #tpu.dimension_semantics<parallel>], iteration_bounds = array<i64: 2, 1>, scalar_prefetch = 0 : i64, scratch_operands = 0 : i64, tpu.core_type = #tpu.core_type<tc>, window_params = [{transform_indices = @transform_0, window_bounds = array<i64: 1, 1, 24, 1>}, {transform_indices = @transform_1, window_bounds = array<i64: 1, 1, 24, 1>}, {transform_indices = @transform_2, window_bounds = array<i64: 1, 1, 24, 4>}, {pipeline_mode = #tpu.pipeline_mode<synchronous>, transform_indices = @transform_3, window_bounds = array<i64: 1, 1>}, {pipeline_mode = #tpu.pipeline_mode<synchronous>, transform_indices = @transform_4, window_bounds = array<i64: 1, 1>}, {transform_indices = @transform_5, window_bounds = array<i64: 1, 1, 24, 4>}]} {
    %c0 = arith.constant 0 : index
    %c0_0 = arith.constant 0 : index
    %c0_1 = arith.constant 0 : index
    %c0_2 = arith.constant 0 : index
    %0 = vector.load %arg2[%c0, %c0_0, %c0_1, %c0_2] : memref<1x1x24x1xf32, #tpu.memory_space<vmem>>, vector<1x1x24x1xf32>
    %1 = vector.shape_cast %0 : vector<1x1x24x1xf32> to vector<24x1xf32>
    %c0_3 = arith.constant 0 : index
    %c0_4 = arith.constant 0 : index
    %c0_5 = arith.constant 0 : index
    %c0_6 = arith.constant 0 : index
    %2 = vector.load %arg3[%c0_3, %c0_4, %c0_5, %c0_6] : memref<1x1x24x1xf32, #tpu.memory_space<vmem>>, vector<1x1x24x1xf32>
    %3 = vector.shape_cast %2 : vector<1x1x24x1xf32> to vector<24x1xf32>
    %c0_7 = arith.constant 0 : index
    %c0_8 = arith.constant 0 : index
    %c0_9 = arith.constant 0 : index
    %c0_10 = arith.constant 0 : index
    %4 = vector.load %arg4[%c0_7, %c0_8, %c0_9, %c0_10] : memref<1x1x24x4xf32, #tpu.memory_space<vmem>>, vector<1x1x24x4xf32>
    %5 = vector.shape_cast %4 : vector<1x1x24x4xf32> to vector<24x4xf32>
    %c0_11 = arith.constant 0 : index
    %c0_12 = arith.constant 0 : index
    %6 = vector.load %arg5[%c0_11, %c0_12] : memref<1x1xf32, #tpu.memory_space<vmem>>, vector<1x1xf32>
    %c0_13 = arith.constant 0 : index
    %c0_14 = arith.constant 0 : index
    %7 = vector.load %arg6[%c0_13, %c0_14] : memref<1x1xf32, #tpu.memory_space<vmem>>, vector<1x1xf32>
    %8 = tpu.iota {dimensions = array<i32: 1>} : vector<1x4xi32>
    %9 = arith.sitofp %8 : vector<1x4xi32> to vector<1x4xf32>
    %cst = arith.constant 1.000000e+00 : f32
    %10 = vector.broadcast %cst : f32 to vector<1x4xf32>
    %11 = arith.addf %9, %10 : vector<1x4xf32>
    %cst_15 = arith.constant 6.250000e-05 : f32
    %12 = vector.broadcast %cst_15 : f32 to vector<24x1xf32>
    %13 = arith.mulf %1, %12 : vector<24x1xf32>
    %14 = vector.broadcast %13 : vector<24x1xf32> to vector<24x4xf32>
    %15 = vector.broadcast %11 : vector<1x4xf32> to vector<24x4xf32>
    %16 = arith.mulf %14, %15 : vector<24x4xf32>
    %17 = vector.broadcast %3 : vector<24x1xf32> to vector<24x4xf32>
    %18 = arith.addf %16, %17 : vector<24x4xf32>
    %19 = math.floor %18 : vector<24x4xf32>
    %20 = arith.subf %18, %19 : vector<24x4xf32>
    %cst_16 = arith.constant 6.28318548 : f32
    %21 = vector.broadcast %cst_16 : f32 to vector<24x4xf32>
    %22 = arith.mulf %21, %20 : vector<24x4xf32>
    %23 = math.sin %22 : vector<24x4xf32>
    %cst_17 = arith.constant 1.000000e-01 : f32
    %24 = vector.broadcast %cst_17 : f32 to vector<24x4xf32>
    %25 = arith.mulf %23, %24 : vector<24x4xf32>
    %cst_18 = arith.constant 0.000000e+00 : f32
    %26 = vector.broadcast %cst_18 : f32 to vector<24x1xf32>
    %27 = arith.cmpf ogt, %1, %26 : vector<24x1xf32>
    %28 = arith.extui %27 : vector<24x1xi1> to vector<24x1xi32>
    %29 = arith.sitofp %28 : vector<24x1xi32> to vector<24x1xf32>
    %30 = vector.broadcast %29 : vector<24x1xf32> to vector<24x4xf32>
    %31 = arith.mulf %25, %30 : vector<24x4xf32>
    %cst_19 = arith.constant 3.000000e-03 : f32
    %32 = vector.broadcast %cst_19 : f32 to vector<24x1xf32>
    %33 = arith.mulf %29, %32 : vector<24x1xf32>
    %cst_20 = arith.constant 1.000000e+00 : f32
    %34 = vector.broadcast %cst_20 : f32 to vector<24x1xf32>
    %35 = arith.subf %34, %29 : vector<24x1xf32>
    %cst_21 = arith.constant 0.0333333351 : f32
    %36 = vector.broadcast %cst_21 : f32 to vector<24x1xf32>
    %37 = arith.mulf %35, %36 : vector<24x1xf32>
    %38 = arith.addf %33, %37 : vector<24x1xf32>
    %39 = vector.broadcast %38 : vector<24x1xf32> to vector<24x4xf32>
    %40 = arith.mulf %39, %5 : vector<24x4xf32>
    %41 = arith.addf %31, %40 : vector<24x4xf32>
    %42 = vector.broadcast %6 : vector<1x1xf32> to vector<24x4xf32>
    %43 = arith.mulf %41, %42 : vector<24x4xf32>
    %44 = vector.broadcast %7 : vector<1x1xf32> to vector<24x4xf32>
    %45 = arith.addf %43, %44 : vector<24x4xf32>
    %46 = math.tanh %45 : vector<24x4xf32>
    %c0_22 = arith.constant 0 : index
    %c0_23 = arith.constant 0 : index
    %c0_24 = arith.constant 0 : index
    %c0_25 = arith.constant 0 : index
    %47 = vector.load %arg7[%c0_22, %c0_23, %c0_24, %c0_25] : memref<1x1x24x4xf32, #tpu.memory_space<vmem>>, vector<1x1x24x4xf32>
    %48 = vector.shape_cast %47 : vector<1x1x24x4xf32> to vector<24x4xf32>
    %49 = vector.shape_cast %46 : vector<24x4xf32> to vector<1x1x24x4xf32>
    tpu.vector_store %arg7[%c0_22, %c0_23, %c0_24, %c0_25], %49 {strides = array<i32>} : memref<1x1x24x4xf32, #tpu.memory_space<vmem>>, vector<1x1x24x4xf32>,
    return
  }
  func.func @transform_0(%arg0: i32, %arg1: i32) -> (i32, i32, i32, i32) {
    %c0_i32 = arith.constant 0 : i32
    %c0_i32_0 = arith.constant 0 : i32
    %c0_i32_1 = arith.constant 0 : i32
    return %arg0, %arg1, %c0_i32, %c0_i32_0 : i32, i32, i32, i32
  }
  func.func @transform_1(%arg0: i32, %arg1: i32) -> (i32, i32, i32, i32) {
    %c0_i32 = arith.constant 0 : i32
    %c0_i32_0 = arith.constant 0 : i32
    %c0_i32_1 = arith.constant 0 : i32
    return %arg0, %arg1, %c0_i32, %c0_i32_0 : i32, i32, i32, i32
  }
  func.func @transform_2(%arg0: i32, %arg1: i32) -> (i32, i32, i32, i32) {
    %c0_i32 = arith.constant 0 : i32
    %c0_i32_0 = arith.constant 0 : i32
    %c0_i32_1 = arith.constant 0 : i32
    return %arg0, %arg1, %c0_i32, %c0_i32_0 : i32, i32, i32, i32
  }
  func.func @transform_3(%arg0: i32, %arg1: i32) -> (i32, i32) {
    %c0_i32 = arith.constant 0 : i32
    %c0_i32_0 = arith.constant 0 : i32
    %c0_i32_1 = arith.constant 0 : i32
    return %c0_i32, %c0_i32_0 : i32, i32
  }
  func.func @transform_4(%arg0: i32, %arg1: i32) -> (i32, i32) {
    %c0_i32 = arith.constant 0 : i32
    %c0_i32_0 = arith.constant 0 : i32
    %c0_i32_1 = arith.constant 0 : i32
    return %c0_i32, %c0_i32_0 : i32, i32
  }
  func.func @transform_5(%arg0: i32, %arg1: i32) -> (i32, i32, i32, i32) {
    %c0_i32 = arith.constant 0 : i32
    %c0_i32_0 = arith.constant 0 : i32
    %c0_i32_1 = arith.constant 0 : i32
    return %arg0, %arg1, %c0_i32, %c0_i32_0 : i32, i32, i32, i32
  }
}

</mosaic_0001>

<llo_original>
// kernel: tpu_custom_call.1
$region0: #{tpu_custom_call.1}
  #allocation0 [shape = 'u32[]', space=smem, size = 0x4, offset = 0x4, fixed_abs, tag = 'smem constant byte address 0x4 - core index']
  #allocation1 [shape = 'u32[144,128]{1,0:T(1,128)}', space=vmem, size = 0x12000, scoped, tag = 'internal scratch']
  %s0 = inlined_call_operand.hbm [shape: f32[32,128], index: 0, kind: input, shape index: {}]
  %s1 = inlined_call_operand.hbm [shape: f32[8,128], index: 1, kind: input, shape index: {}]
  %s2 = inlined_call_operand.hbm [shape: f32[32,128], index: 2, kind: output, shape index: {}]
  %s3 = sld [smem:[#allocation0]]
  $region49: #{tpu_custom_call.1} parent=0
    _
  %s5 = ssub.s32 1, %s3
  %s6 = scalar_select 0, %s5, %s3
  $region1: #{tpu_custom_call.1} parent=0
    #allocation2 [shape = 'u8[8192]{0}', space=vmem, size = 0x2000, scoped, tag = 'input window, operand 0']
    #allocation3 [shape = 's32[2]{0}', space=sflag, size = 0x8, scoped, tag = 'scoped memory for tpu_custom_call.1']
    #allocation4 [shape = 's32[2]{0}', space=sflag, size = 0x8, scoped, tag = 'scoped memory for tpu_custom_call.1']
    #allocation5 [shape = 'u8[4096]{0}', space=vmem, size = 0x1000, scoped, tag = 'input window, operand 1, single buffered']
    #allocation6 [shape = 's32[1]{0}', space=sflag, size = 0x4, scoped, tag = 'scoped memory for tpu_custom_call.1']
    #allocation7 [shape = 'u8[8192]{0}', space=vmem, size = 0x2000, scoped, tag = 'output window, operand 0']
    %7 = vsyncpa [#allocation3], 0
    %s8 = scalar_lea.sflag [#allocation3], 1
    %9 = vsyncpa %s8, 0
    %10 = vsyncpa [#allocation6], 0
    %11 = vsyncpa [#allocation4], 0
    %s12 = scalar_lea.sflag [#allocation4], 1
    %13 = vsyncpa %s12, 0
    loop: start=0, step=1, limit=6
    $region2: #{tpu_custom_call.1} parent=1 // loop_pre_header
      _
    $region3: #{tpu_custom_call.1} parent=1 // loop_header
      %s15 = sphi 0, %s19
      %p16 = scmp.ge.s32.totalorder %s15, 6
      %s25 = sphi 0, %s27
      %s28 = sphi 0, %s25
      %s29 = sphi 0, %s28
      %s45 = sphi 0, %s29
      %s49 = sphi 0, %s49
      %s51 = sphi 0, %s49
      %s52 = sphi 0, %s51
      %s66 = sphi 0, %s52
      %s72 = sphi 0, %s74
      %s75 = sphi 0, %s72
      %s76 = sphi 0, %s75
      %s92 = sphi 0, %s76
    $region4: #{tpu_custom_call.1} parent=1 // loop_header_branch
      %18 = sbr.rel (%p16) target = $region8
    $region5: #{tpu_custom_call.1} parent=1 // loop_body
      %s20 = ssub.s32 %s15, 1
      %s21 = ssub.s32 %s15, 2
      %s22 = sadd.s32 %s15, 1
      %s23 = ssub.s32 %s15, %s22
      %p24 = scmp.eq.s32.totalorder %s23, 0
      %s26 = sadd.s32 %s25, 1
      %s27 = scalar_select %p24, %s25, %s26
      %p30 = pneg %p24
      %p31 = scmp.eq.s32.totalorder %s15, 3
      %p32 = por %p30, %p31
      %p33 = scmp.ne.s32.totalorder %s25, %s28
      %p34 = scmp.eq.s32.totalorder %s15, 0
      %p35 = por %p33, %p34
      %p36 = scmp.ne.s32.totalorder %s25, %s28
      %p37 = scmp.eq.s32.totalorder %s20, 3
      %p38 = por %p36, %p37
      %p39 = scmp.ne.s32.totalorder %s28, %s29
      %p40 = scmp.eq.s32.totalorder %s20, 0
      %p41 = por %p39, %p40
      %p42 = scmp.ne.s32.totalorder %s28, %s29
      %p43 = scmp.eq.s32.totalorder %s21, 3
      %p44 = por %p42, %p43
      %p46 = scmp.ne.s32.totalorder %s29, %s45
      %p47 = scmp.eq.s32.totalorder %s21, 0
      %p48 = por %p46, %p47
      %s50 = sadd.s32 %s49, 1
      %p53 = scmp.eq.s32.totalorder %s15, 3
      %p54 = scmp.ne.s32.totalorder %s49, %s51
      %p55 = scmp.eq.s32.totalorder %s15, 0
      %p56 = por %p54, %p55
      %p57 = scmp.ne.s32.totalorder %s49, %s51
      %p58 = scmp.eq.s32.totalorder %s20, 3
      %p59 = por %p57, %p58
      %p60 = scmp.ne.s32.totalorder %s51, %s52
      %p61 = scmp.eq.s32.totalorder %s20, 0
      %p62 = por %p60, %p61
      %p63 = scmp.ne.s32.totalorder %s51, %s52
      %p64 = scmp.eq.s32.totalorder %s21, 3
      %p65 = por %p63, %p64
      %p67 = scmp.ne.s32.totalorder %s52, %s66
      %p68 = scmp.eq.s32.totalorder %s21, 0
      %p69 = por %p67, %p68
      %s70 = ssub.s32 %s15, %s22
      %p71 = scmp.eq.s32.totalorder %s70, 0
      %s73 = sadd.s32 %s72, 1
      %s74 = scalar_select %p71, %s72, %s73
      %p77 = pneg %p71
      %p78 = scmp.eq.s32.totalorder %s15, 3
      %p79 = por %p77, %p78
      %p80 = scmp.ne.s32.totalorder %s72, %s75
      %p81 = scmp.eq.s32.totalorder %s15, 0
      %p82 = por %p80, %p81
      %p83 = scmp.ne.s32.totalorder %s72, %s75
      %p84 = scmp.eq.s32.totalorder %s20, 3
      %p85 = por %p83, %p84
      %p86 = scmp.ne.s32.totalorder %s75, %s76
      %p87 = scmp.eq.s32.totalorder %s20, 0
      %p88 = por %p86, %p87
      %p89 = scmp.ne.s32.totalorder %s75, %s76
      %p90 = scmp.eq.s32.totalorder %s21, 3
      %p91 = por %p89, %p90
      %p93 = scmp.ne.s32.totalorder %s76, %s92
      %p94 = scmp.eq.s32.totalorder %s21, 0
      %p95 = por %p93, %p94
      %p96 = scmp.le.s32.totalorder 1, %s15
      %p97 = scmp.lt.s32.totalorder %s15, 5
      %p98 = pnand %p96, %p97
      %p99 = pneg %p98
      // Predicated region
      $region9: #{tpu_custom_call.1} parent=5 // pred_check
        _
      $region10: #{tpu_custom_call.1} parent=5 // pred_check_branch
        %101 = sbr.rel (%p98) target = $region12
      $region11: #{tpu_custom_call.1} parent=5 // pred_region
        %s102 = ssub.s32 %s15, 1
        // Predicated region
        $region13: #{tpu_custom_call.1} parent=11 // pred_check
          %p103 = pneg %p62
        $region14: #{tpu_custom_call.1} parent=11 // pred_check_branch
          %105 = sbr.rel (%p103) target = $region16
        $region15: #{tpu_custom_call.1} parent=11 // pred_region
          %s107 = ssub.s32 128, 128
          %108 = vsyncadd [#allocation6], %s107
          %s110 = sshll.u32 [#allocation5], 4
          %s111 = int_to_ptr.vmem [resolvable:$true] %s110
          %113 = dma.hbm_to_vmem [thread:$0]  %s1, 128, %s111, [#allocation6]
        $region16: #{tpu_custom_call.1} parent=11 // pred_fallthru
          _
      $region12: #{tpu_custom_call.1} parent=5 // pred_fallthru
        _
      %p114 = scmp.lt.s32.totalorder %s15, 4
      // Predicated region
      $region17: #{tpu_custom_call.1} parent=5 // pred_check
        %p115 = pneg %p114
      $region18: #{tpu_custom_call.1} parent=5 // pred_check_branch
        %117 = sbr.rel (%p115) target = $region20
      $region19: #{tpu_custom_call.1} parent=5 // pred_region
        // Predicated region
        $region21: #{tpu_custom_call.1} parent=19 // pred_check
          %p118 = pneg %p35
        $region22: #{tpu_custom_call.1} parent=19 // pred_check_branch
          %120 = sbr.rel (%p118) target = $region24
        $region23: #{tpu_custom_call.1} parent=19 // pred_region
          %s121 = sand.u32 %s25, 1
          %s122 = scalar_lea.sflag [#allocation3], %s121
          %s123 = sand.u32 %s25, 1
          %s124 = smul.addr %s123, 8
          %s125 = scalar_lea.vmem [#allocation2], %s124
          %s127 = ssub.s32 128, 128
          %128 = vsyncadd %s122, %s127
          %s129 = smul.addr %s15, 128
          %s130 = scalar_lea.hbm %s0, %s129
          %s132 = sshll.u32 %s125, 4
          %s133 = int_to_ptr.vmem [resolvable:$true] %s132
          %135 = dma.hbm_to_vmem [thread:$0]  %s130, 128, %s133, %s122
        $region24: #{tpu_custom_call.1} parent=19 // pred_fallthru
          _
      $region20: #{tpu_custom_call.1} parent=5 // pred_fallthru
        _
      %p136 = scmp.le.s32.totalorder 1, %s15
      %p137 = scmp.lt.s32.totalorder %s15, 5
      %p138 = pnand %p136, %p137
      %p139 = pneg %p138
      // Predicated region
      $region25: #{tpu_custom_call.1} parent=5 // pred_check
        _
      $region26: #{tpu_custom_call.1} parent=5 // pred_check_branch
        %141 = sbr.rel (%p138) target = $region28
      $region27: #{tpu_custom_call.1} parent=5 // pred_region
        %s142 = ssub.s32 %s15, 1
        %s143 = sand.u32 %s28, 1
        %s144 = scalar_lea.sflag [#allocation3], %s143
        %s145 = sand.u32 %s28, 1
        %s146 = smul.addr %s145, 8
        %s147 = scalar_lea.vmem [#allocation2], %s146
        // Predicated region
        $region29: #{tpu_custom_call.1} parent=27 // pred_check
          %p148 = pneg %p41
        $region30: #{tpu_custom_call.1} parent=27 // pred_check_branch
          %150 = sbr.rel (%p148) target = $region32
        $region31: #{tpu_custom_call.1} parent=27 // pred_region
          %151 = dma.done %s144, 128
        $region32: #{tpu_custom_call.1} parent=27 // pred_fallthru
          _
        // Predicated region
        $region33: #{tpu_custom_call.1} parent=27 // pred_check
          %p152 = pneg %p62
        $region34: #{tpu_custom_call.1} parent=27 // pred_check_branch
          %154 = sbr.rel (%p152) target = $region36
        $region35: #{tpu_custom_call.1} parent=27 // pred_region
          %155 = dma.done [#allocation6], 128
        $region36: #{tpu_custom_call.1} parent=27 // pred_fallthru
          _
        %s156 = sand.u32 %s28, 1
        %s157 = scalar_lea.sflag [#allocation3], %s156
        %s158 = sand.u32 %s28, 1
        %s159 = smul.addr %s158, 8
        %s160 = scalar_lea.vmem [#allocation2], %s159
        %p161 = pneg %p41
        %p162 = pneg %p38
        %p163 = pneg %p62
        %p164 = pneg %p59
        %p165 = pneg %p88
        %p166 = pneg %p85
        %s167 = sand.u32 %s75, 1
        %s168 = scalar_lea.sflag [#allocation4], %s167
        %s169 = sand.u32 %s75, 1
        %s170 = smul.addr %s169, 8
        %s171 = scalar_lea.vmem [#allocation7], %s170
        %v172 = vld [vmem:[%s147] sm:$0xff]
        %v173 = vld [vmem:[#allocation5] sm:$0xff]
        %v174 = vadd.f32 %v172, %v173
        %175 = vst [vmem:[%s171] sm:$0xff] %v174
        %s176 = sand.u32 %s75, 1
        %s177 = scalar_lea.sflag [#allocation4], %s176
        %s178 = sand.u32 %s75, 1
        %s179 = smul.addr %s178, 8
        %s180 = scalar_lea.vmem [#allocation7], %s179
        // Predicated region
        $region37: #{tpu_custom_call.1} parent=27 // pred_check
          %p181 = pneg %p85
        $region38: #{tpu_custom_call.1} parent=27 // pred_check_branch
          %183 = sbr.rel (%p181) target = $region40
        $region39: #{tpu_custom_call.1} parent=27 // pred_region
          %s185 = ssub.s32 128, 128
          %186 = vsyncadd %s177, %s185
          %s187 = smul.addr %s20, 128
          %s188 = scalar_lea.hbm %s2, %s187
          %s190 = sshll.u32 %s180, 4
          %s191 = int_to_ptr.vmem [resolvable:$true] %s190
          %193 = dma.vmem_to_hbm [thread:$0]  %s191, 128, %s188, %s177
        $region40: #{tpu_custom_call.1} parent=27 // pred_fallthru
          _
      $region28: #{tpu_custom_call.1} parent=5 // pred_fallthru
        _
      %p194 = scmp.le.s32.totalorder 2, %s15
      // Predicated region
      $region41: #{tpu_custom_call.1} parent=5 // pred_check
        %p195 = pneg %p194
      $region42: #{tpu_custom_call.1} parent=5 // pred_check_branch
        %197 = sbr.rel (%p195) target = $region44
      $region43: #{tpu_custom_call.1} parent=5 // pred_region
        %s198 = ssub.s32 %s15, 2
        // Predicated region
        $region45: #{tpu_custom_call.1} parent=43 // pred_check
          %p199 = pneg %p91
        $region46: #{tpu_custom_call.1} parent=43 // pred_check_branch
          %201 = sbr.rel (%p199) target = $region48
        $region47: #{tpu_custom_call.1} parent=43 // pred_region
          %s202 = sand.u32 %s76, 1
          %s203 = scalar_lea.sflag [#allocation4], %s202
          %s204 = sand.u32 %s76, 1
          %s205 = smul.addr %s204, 8
          %s206 = scalar_lea.vmem [#allocation7], %s205
          %207 = dma.done %s203, 128
        $region48: #{tpu_custom_call.1} parent=43 // pred_fallthru
          _
      $region44: #{tpu_custom_call.1} parent=5 // pred_fallthru
        _
    $region6: #{tpu_custom_call.1} parent=1 // loop_footer
      %s19 = sadd.s32 1, %s15
    $region7: #{tpu_custom_call.1} parent=1 // loop_footer_branch
      %14 = sbr.rel target = $region3
    $region8: #{tpu_custom_call.1} parent=1 // loop_exit
      _
    %208 = vsyncpa [#allocation3], 1
    %s209 = scalar_lea.sflag [#allocation3], 1
    %210 = vsyncpa %s209, 1
    %211 = vsyncpa [#allocation6], 1
    %212 = vsyncpa [#allocation4], 1
    %s213 = scalar_lea.sflag [#allocation4], 1
    %214 = vsyncpa %s213, 1

// kernel: tpu_custom_call.1
$region0: #{tpu_custom_call.1}
  #allocation0 [shape = 'u32[]', space=smem, size = 0x4, offset = 0x4, fixed_abs, tag = 'smem constant byte address 0x4 - core index']
  #allocation1 [shape = 'u32[144,128]{1,0:T(1,128)}', space=vmem, size = 0x12000, scoped, tag = 'internal scratch']
  #allocation2 [shape = 'f32[1,1]{1,0:T(1,128)S(1)}', space=vmem, size = 0x200, scoped, tag = 'scoped memory for tpu_custom_call.1']
  #allocation3 [shape = 'f32[1,1]{1,0:T(1,128)S(1)}', space=vmem, size = 0x200, scoped, tag = 'scoped memory for tpu_custom_call.1']
  %s0 = inlined_call_operand.hbm [shape: f32[2,1,24,1], index: 0, kind: input, shape index: {}]
  %s1 = inlined_call_operand.hbm [shape: f32[2,1,24,1], index: 1, kind: input, shape index: {}]
  %s2 = inlined_call_operand.hbm [shape: f32[2,1,24,4], index: 2, kind: input, shape index: {}]
  %s3 = inlined_call_operand.<no memory space> [shape: f32[1,1], index: 3, kind: input, shape index: {}]
  %s4 = inlined_call_operand.<no memory space> [shape: f32[1,1], index: 4, kind: input, shape index: {}]
  %s5 = inlined_call_operand.hbm [shape: f32[2,1,24,4], index: 5, kind: output, shape index: {}]
  %s6 = sld [smem:[#allocation0]]
  $region65: #{tpu_custom_call.1} parent=0
    _
  %s8 = ssub.s32 1, %s6
  %s9 = scalar_select 0, %s8, %s6
  %v10 = vstv %s3
  %11 = vst [vmem:[#allocation2] sm:$0x1] %v10
  %v12 = vstv %s4
  %13 = vst [vmem:[#allocation3] sm:$0x1] %v12
  $region1: #{tpu_custom_call.1} parent=0
    #allocation4 [shape = 'u8[24576]{0}', space=vmem, size = 0x6000, scoped, tag = 'input window, operand 0']
    #allocation5 [shape = 's32[2]{0}', space=sflag, size = 0x8, scoped, tag = 'scoped memory for tpu_custom_call.1']
    #allocation6 [shape = 's32[2]{0}', space=sflag, size = 0x8, scoped, tag = 'scoped memory for tpu_custom_call.1']
    #allocation7 [shape = 'u8[24576]{0}', space=vmem, size = 0x6000, scoped, tag = 'input window, operand 1']
    #allocation8 [shape = 's32[2]{0}', space=sflag, size = 0x8, scoped, tag = 'scoped memory for tpu_custom_call.1']
    #allocation9 [shape = 'u8[24576]{0}', space=vmem, size = 0x6000, scoped, tag = 'input window, operand 2']
    #allocation10 [shape = 'u8[24576]{0}', space=vmem, size = 0x6000, scoped, tag = 'output window, operand 0']
    %14 = vsyncpa [#allocation5], 0
    %s15 = scalar_lea.sflag [#allocation5], 1
    %16 = vsyncpa %s15, 0
    %17 = vsyncpa [#allocation8], 0
    %s18 = scalar_lea.sflag [#allocation8], 1
    %19 = vsyncpa %s18, 0
    %20 = vsyncpa [#allocation6], 0
    %s21 = scalar_lea.sflag [#allocation6], 1
    %22 = vsyncpa %s21, 0
    loop: start=0, step=1, limit=4
    $region2: #{tpu_custom_call.1} parent=1 // loop_pre_header
      _
    $region3: #{tpu_custom_call.1} parent=1 // loop_header
      %s24 = sphi 0, %s28
      %p25 = scmp.ge.s32.totalorder %s24, 4
      %s31 = sphi 0, %s43
      %s32 = sphi 0, %s39
      %s33 = sphi 0, %s31
      %s34 = sphi 0, %s32
      %s35 = sphi 0, %s33
      %s36 = sphi 0, %s34
      %s48 = sphi 0, %s50
      %s51 = sphi 0, %s48
      %s52 = sphi 0, %s51
      %s68 = sphi 0, %s52
      %s76 = sphi 0, %s78
      %s79 = sphi 0, %s76
      %s80 = sphi 0, %s79
      %s96 = sphi 0, %s80
      %s104 = sphi 0, %s106
      %s107 = sphi 0, %s104
      %s108 = sphi 0, %s107
      %s124 = sphi 0, %s108
      %s128 = sphi 0, %s128
      %s130 = sphi 0, %s128
      %s131 = sphi 0, %s130
      %s145 = sphi 0, %s131
      %s149 = sphi 0, %s149
      %s151 = sphi 0, %s149
      %s152 = sphi 0, %s151
      %s166 = sphi 0, %s152
      %s174 = sphi 0, %s176
      %s177 = sphi 0, %s174
      %s178 = sphi 0, %s177
      %s194 = sphi 0, %s178
    $region4: #{tpu_custom_call.1} parent=1 // loop_header_branch
      %27 = sbr.rel (%p25) target = $region8
    $region5: #{tpu_custom_call.1} parent=1 // loop_body
      %s29 = ssub.s32 %s24, 1
      %s30 = ssub.s32 %s24, 2
      %s37 = sadd.s32 1, %s32
      %p38 = scmp.ge.s32.totalorder %s37, 1
      %s39 = scalar_select %p38, 0, %s37
      %s40 = sadd.s32 1, %s31
      %s41 = scalar_select %p38, %s40, %s31
      %p42 = scmp.ge.s32.totalorder %s41, 2
      %s43 = scalar_select %p42, 0, %s41
      %s44 = ssub.s32 %s31, %s43
      %s45 = ssub.s32 %s32, %s39
      %s46 = sor.u32 %s44, %s45
      %p47 = scmp.eq.s32.totalorder %s46, 0
      %s49 = sadd.s32 %s48, 1
      %s50 = scalar_select %p47, %s48, %s49
      %p53 = pneg %p47
      %p54 = scmp.eq.s32.totalorder %s24, 1
      %p55 = por %p53, %p54
      %p56 = scmp.ne.s32.totalorder %s48, %s51
      %p57 = scmp.eq.s32.totalorder %s24, 0
      %p58 = por %p56, %p57
      %p59 = scmp.ne.s32.totalorder %s48, %s51
      %p60 = scmp.eq.s32.totalorder %s29, 1
      %p61 = por %p59, %p60
      %p62 = scmp.ne.s32.totalorder %s51, %s52
      %p63 = scmp.eq.s32.totalorder %s29, 0
      %p64 = por %p62, %p63
      %p65 = scmp.ne.s32.totalorder %s51, %s52
      %p66 = scmp.eq.s32.totalorder %s30, 1
      %p67 = por %p65, %p66
      %p69 = scmp.ne.s32.totalorder %s52, %s68
      %p70 = scmp.eq.s32.totalorder %s30, 0
      %p71 = por %p69, %p70
      %s72 = ssub.s32 %s31, %s43
      %s73 = ssub.s32 %s32, %s39
      %s74 = sor.u32 %s72, %s73
      %p75 = scmp.eq.s32.totalorder %s74, 0
      %s77 = sadd.s32 %s76, 1
      %s78 = scalar_select %p75, %s76, %s77
      %p81 = pneg %p75
      %p82 = scmp.eq.s32.totalorder %s24, 1
      %p83 = por %p81, %p82
      %p84 = scmp.ne.s32.totalorder %s76, %s79
      %p85 = scmp.eq.s32.totalorder %s24, 0
      %p86 = por %p84, %p85
      %p87 = scmp.ne.s32.totalorder %s76, %s79
      %p88 = scmp.eq.s32.totalorder %s29, 1
      %p89 = por %p87, %p88
      %p90 = scmp.ne.s32.totalorder %s79, %s80
      %p91 = scmp.eq.s32.totalorder %s29, 0
      %p92 = por %p90, %p91
      %p93 = scmp.ne.s32.totalorder %s79, %s80
      %p94 = scmp.eq.s32.totalorder %s30, 1
      %p95 = por %p93, %p94
      %p97 = scmp.ne.s32.totalorder %s80, %s96
      %p98 = scmp.eq.s32.totalorder %s30, 0
      %p99 = por %p97, %p98
      %s100 = ssub.s32 %s31, %s43
      %s101 = ssub.s32 %s32, %s39
      %s102 = sor.u32 %s100, %s101
      %p103 = scmp.eq.s32.totalorder %s102, 0
      %s105 = sadd.s32 %s104, 1
      %s106 = scalar_select %p103, %s104, %s105
      %p109 = pneg %p103
      %p110 = scmp.eq.s32.totalorder %s24, 1
      %p111 = por %p109, %p110
      %p112 = scmp.ne.s32.totalorder %s104, %s107
      %p113 = scmp.eq.s32.totalorder %s24, 0
      %p114 = por %p112, %p113
      %p115 = scmp.ne.s32.totalorder %s104, %s107
      %p116 = scmp.eq.s32.totalorder %s29, 1
      %p117 = por %p115, %p116
      %p118 = scmp.ne.s32.totalorder %s107, %s108
      %p119 = scmp.eq.s32.totalorder %s29, 0
      %p120 = por %p118, %p119
      %p121 = scmp.ne.s32.totalorder %s107, %s108
      %p122 = scmp.eq.s32.totalorder %s30, 1
      %p123 = por %p121, %p122
      %p125 = scmp.ne.s32.totalorder %s108, %s124
      %p126 = scmp.eq.s32.totalorder %s30, 0
      %p127 = por %p125, %p126
      %s129 = sadd.s32 %s128, 1
      %p132 = scmp.eq.s32.totalorder %s24, 1
      %p133 = scmp.ne.s32.totalorder %s128, %s130
      %p134 = scmp.eq.s32.totalorder %s24, 0
      %p135 = por %p133, %p134
      %p136 = scmp.ne.s32.totalorder %s128, %s130
      %p137 = scmp.eq.s32.totalorder %s29, 1
      %p138 = por %p136, %p137
      %p139 = scmp.ne.s32.totalorder %s130, %s131
      %p140 = scmp.eq.s32.totalorder %s29, 0
      %p141 = por %p139, %p140
      %p142 = scmp.ne.s32.totalorder %s130, %s131
      %p143 = scmp.eq.s32.totalorder %s30, 1
      %p144 = por %p142, %p143
      %p146 = scmp.ne.s32.totalorder %s131, %s145
      %p147 = scmp.eq.s32.totalorder %s30, 0
      %p148 = por %p146, %p147
      %s150 = sadd.s32 %s149, 1
      %p153 = scmp.eq.s32.totalorder %s24, 1
      %p154 = scmp.ne.s32.totalorder %s149, %s151
      %p155 = scmp.eq.s32.totalorder %s24, 0
      %p156 = por %p154, %p155
      %p157 = scmp.ne.s32.totalorder %s149, %s151
      %p158 = scmp.eq.s32.totalorder %s29, 1
      %p159 = por %p157, %p158
      %p160 = scmp.ne.s32.totalorder %s151, %s152
      %p161 = scmp.eq.s32.totalorder %s29, 0
      %p162 = por %p160, %p161
      %p163 = scmp.ne.s32.totalorder %s151, %s152
      %p164 = scmp.eq.s32.totalorder %s30, 1
      %p165 = por %p163, %p164
      %p167 = scmp.ne.s32.totalorder %s152, %s166
      %p168 = scmp.eq.s32.totalorder %s30, 0
      %p169 = por %p167, %p168
      %s170 = ssub.s32 %s31, %s43
      %s171 = ssub.s32 %s32, %s39
      %s172 = sor.u32 %s170, %s171
      %p173 = scmp.eq.s32.totalorder %s172, 0
      %s175 = sadd.s32 %s174, 1
      %s176 = scalar_select %p173, %s174, %s175
      %p179 = pneg %p173
      %p180 = scmp.eq.s32.totalorder %s24, 1
      %p181 = por %p179, %p180
      %p182 = scmp.ne.s32.totalorder %s174, %s177
      %p183 = scmp.eq.s32.totalorder %s24, 0
      %p184 = por %p182, %p183
      %p185 = scmp.ne.s32.totalorder %s174, %s177
      %p186 = scmp.eq.s32.totalorder %s29, 1
      %p187 = por %p185, %p186
      %p188 = scmp.ne.s32.totalorder %s177, %s178
      %p189 = scmp.eq.s32.totalorder %s29, 0
      %p190 = por %p188, %p189
      %p191 = scmp.ne.s32.totalorder %s177, %s178
      %p192 = scmp.eq.s32.totalorder %s30, 1
      %p193 = por %p191, %p192
      %p195 = scmp.ne.s32.totalorder %s178, %s194
      %p196 = scmp.eq.s32.totalorder %s30, 0
      %p197 = por %p195, %p196
      %p198 = scmp.le.s32.totalorder 1, %s24
      %p199 = scmp.lt.s32.totalorder %s24, 3
      %p200 = pnand %p198, %p199
      %p201 = pneg %p200
      // Predicated region
      $region9: #{tpu_custom_call.1} parent=5 // pred_check
        _
      $region10: #{tpu_custom_call.1} parent=5 // pred_check_branch
        %203 = sbr.rel (%p200) target = $region12
      $region11: #{tpu_custom_call.1} parent=5 // pred_region
        %s204 = ssub.s32 %s24, 1
        // Predicated region
        $region13: #{tpu_custom_call.1} parent=11 // pred_check
          %p205 = pneg %p141
        $region14: #{tpu_custom_call.1} parent=11 // pred_check_branch
          %207 = sbr.rel (%p205) target = $region16
        $region15: #{tpu_custom_call.1} parent=11 // pred_region
          _
        $region16: #{tpu_custom_call.1} parent=11 // pred_fallthru
          _
        // Predicated region
        $region17: #{tpu_custom_call.1} parent=11 // pred_check
          %p208 = pneg %p162
        $region18: #{tpu_custom_call.1} parent=11 // pred_check_branch
          %210 = sbr.rel (%p208) target = $region20
        $region19: #{tpu_custom_call.1} parent=11 // pred_region
          _
        $region20: #{tpu_custom_call.1} parent=11 // pred_fallthru
          _
      $region12: #{tpu_custom_call.1} parent=5 // pred_fallthru
        _
      %p211 = scmp.lt.s32.totalorder %s24, 2
      // Predicated region
      $region21: #{tpu_custom_call.1} parent=5 // pred_check
        %p212 = pneg %p211
      $region22: #{tpu_custom_call.1} parent=5 // pred_check_branch
        %214 = sbr.rel (%p212) target = $region24
      $region23: #{tpu_custom_call.1} parent=5 // pred_region
        // Predicated region
        $region25: #{tpu_custom_call.1} parent=23 // pred_check
          %p215 = pneg %p58
        $region26: #{tpu_custom_call.1} parent=23 // pred_check_branch
          %217 = sbr.rel (%p215) target = $region28
        $region27: #{tpu_custom_call.1} parent=23 // pred_region
          %s218 = sand.u32 %s48, 1
          %s219 = scalar_lea.sflag [#allocation5], %s218
          %s220 = sand.u32 %s48, 1
          %s221 = smul.addr %s220, 24
          %s222 = scalar_lea.vmem [#allocation4], %s221
          %s224 = ssub.s32 384, 384
          %225 = vsyncadd %s219, %s224
          %s226 = smul.addr %s32, 3
          %s227 = smul.addr %s31, 3
          %s228 = sadd.s32 %s226, %s227
          %s229 = smul.addr %s228, 128
          %s230 = scalar_lea.hbm %s0, %s229
          %s231 = sshll.u32 %s222, 4
          %s232 = int_to_ptr.vmem [resolvable:$true] %s231
          %237 = dma.hbm_to_vmem [thread:$0]  %s230, 384, %s232, %s219, 128, 128, 8
        $region28: #{tpu_custom_call.1} parent=23 // pred_fallthru
          _
        // Predicated region
        $region29: #{tpu_custom_call.1} parent=23 // pred_check
          %p238 = pneg %p86
        $region30: #{tpu_custom_call.1} parent=23 // pred_check_branch
          %240 = sbr.rel (%p238) target = $region32
        $region31: #{tpu_custom_call.1} parent=23 // pred_region
          %s241 = sand.u32 %s24, 1
          %s242 = scalar_lea.sflag [#allocation8], %s241
          %s243 = sand.u32 %s76, 1
          %s244 = smul.addr %s243, 24
          %s245 = scalar_lea.vmem [#allocation7], %s244
          %s247 = ssub.s32 384, 384
          %248 = vsyncadd %s242, %s247
          %s249 = smul.addr %s32, 3
          %s250 = smul.addr %s31, 3
          %s251 = sadd.s32 %s249, %s250
          %s252 = smul.addr %s251, 128
          %s253 = scalar_lea.hbm %s1, %s252
          %s254 = sshll.u32 %s245, 4
          %s255 = int_to_ptr.vmem [resolvable:$true] %s254
          %260 = dma.hbm_to_vmem [thread:$0]  %s253, 384, %s255, %s242, 128, 128, 8
        $region32: #{tpu_custom_call.1} parent=23 // pred_fallthru
          _
        // Predicated region
        $region33: #{tpu_custom_call.1} parent=23 // pred_check
          %p261 = pneg %p114
        $region34: #{tpu_custom_call.1} parent=23 // pred_check_branch
          %263 = sbr.rel (%p261) target = $region36
        $region35: #{tpu_custom_call.1} parent=23 // pred_region
          %s264 = sand.u32 %s24, 1
          %s265 = scalar_lea.sflag [#allocation8], %s264
          %s266 = sand.u32 %s104, 1
          %s267 = smul.addr %s266, 24
          %s268 = scalar_lea.vmem [#allocation9], %s267
          %s270 = ssub.s32 384, 384
          %271 = vsyncadd %s265, %s270
          %s272 = smul.addr %s32, 3
          %s273 = smul.addr %s31, 3
          %s274 = sadd.s32 %s272, %s273
          %s275 = smul.addr %s274, 128
          %s276 = scalar_lea.hbm %s2, %s275
          %s277 = sshll.u32 %s268, 4
          %s278 = int_to_ptr.vmem [resolvable:$true] %s277
          %283 = dma.hbm_to_vmem [thread:$0]  %s276, 384, %s278, %s265, 128, 128, 8
        $region36: #{tpu_custom_call.1} parent=23 // pred_fallthru
          _
      $region24: #{tpu_custom_call.1} parent=5 // pred_fallthru
        _
      %p284 = scmp.le.s32.totalorder 1, %s24
      %p285 = scmp.lt.s32.totalorder %s24, 3
      %p286 = pnand %p284, %p285
      %p287 = pneg %p286
      // Predicated region
      $region37: #{tpu_custom_call.1} parent=5 // pred_check
        _
      $region38: #{tpu_custom_call.1} parent=5 // pred_check_branch
        %289 = sbr.rel (%p286) target = $region40
      $region39: #{tpu_custom_call.1} parent=5 // pred_region
        %s290 = ssub.s32 %s24, 1
        %s291 = sand.u32 %s51, 1
        %s292 = scalar_lea.sflag [#allocation5], %s291
        %s293 = sand.u32 %s51, 1
        %s294 = smul.addr %s293, 24
        %s295 = scalar_lea.vmem [#allocation4], %s294
        // Predicated region
        $region41: #{tpu_custom_call.1} parent=39 // pred_check
          %p296 = pneg %p64
        $region42: #{tpu_custom_call.1} parent=39 // pred_check_branch
          %298 = sbr.rel (%p296) target = $region44
        $region43: #{tpu_custom_call.1} parent=39 // pred_region
          %299 = dma.done %s292, 384
        $region44: #{tpu_custom_call.1} parent=39 // pred_fallthru
          _
        %s300 = sand.u32 %s29, 1
        %s301 = scalar_lea.sflag [#allocation8], %s300
        %s302 = sand.u32 %s79, 1
        %s303 = smul.addr %s302, 24
        %s304 = scalar_lea.vmem [#allocation7], %s303
        // Predicated region
        $region45: #{tpu_custom_call.1} parent=39 // pred_check
          %p305 = pneg %p92
        $region46: #{tpu_custom_call.1} parent=39 // pred_check_branch
          %307 = sbr.rel (%p305) target = $region48
        $region47: #{tpu_custom_call.1} parent=39 // pred_region
          %308 = dma.done %s301, 384
        $region48: #{tpu_custom_call.1} parent=39 // pred_fallthru
          _
        %s309 = sand.u32 %s29, 1
        %s310 = scalar_lea.sflag [#allocation8], %s309
        %s311 = sand.u32 %s107, 1
        %s312 = smul.addr %s311, 24
        %s313 = scalar_lea.vmem [#allocation9], %s312
        // Predicated region
        $region49: #{tpu_custom_call.1} parent=39 // pred_check
          %p314 = pneg %p120
        $region50: #{tpu_custom_call.1} parent=39 // pred_check_branch
          %316 = sbr.rel (%p314) target = $region52
        $region51: #{tpu_custom_call.1} parent=39 // pred_region
          %317 = dma.done %s310, 384
        $region52: #{tpu_custom_call.1} parent=39 // pred_fallthru
          _
        %s318 = sand.u32 %s51, 1
        %s319 = scalar_lea.sflag [#allocation5], %s318
        %s320 = sand.u32 %s51, 1
        %s321 = smul.addr %s320, 24
        %s322 = scalar_lea.vmem [#allocation4], %s321
        %p323 = pneg %p64
        %p324 = pneg %p61
        %s325 = sand.u32 %s29, 1
        %s326 = scalar_lea.sflag [#allocation8], %s325
        %s327 = sand.u32 %s79, 1
        %s328 = smul.addr %s327, 24
        %s329 = scalar_lea.vmem [#allocation7], %s328
        %p330 = pneg %p92
        %p331 = pneg %p89
        %s332 = sand.u32 %s29, 1
        %s333 = scalar_lea.sflag [#allocation8], %s332
        %s334 = sand.u32 %s107, 1
        %s335 = smul.addr %s334, 24
        %s336 = scalar_lea.vmem [#allocation9], %s335
        %p337 = pneg %p120
        %p338 = pneg %p117
        %p339 = pneg %p141
        %p340 = pneg %p138
        %p341 = pneg %p162
        %p342 = pneg %p159
        %p343 = pneg %p190
        %p344 = pneg %p187
        %s345 = sand.u32 %s177, 1
        %s346 = scalar_lea.sflag [#allocation6], %s345
        %s347 = sand.u32 %s177, 1
        %s348 = smul.addr %s347, 24
        %s349 = scalar_lea.vmem [#allocation10], %s348
        %v350 = vld [vmem:[%s295] sm:$0xff]
        %v351 = vld [vmem:[%s295 + $0x8] sm:$0xff]
        %v352 = vld [vmem:[%s295 + $0x10] sm:$0xff]
        %v353 = vld [vmem:[%s304] sm:$0xff]
        %v354 = vld [vmem:[%s304 + $0x8] sm:$0xff]
        %v355 = vld [vmem:[%s304 + $0x10] sm:$0xff]
        %v356 = vld [vmem:[%s313] sm:$0xff]
        %v357 = vld [vmem:[%s313 + $0x8] sm:$0xff]
        %v358 = vld [vmem:[%s313 + $0x10] sm:$0xff]
        %v359 = vld [vmem:[#allocation2] sm:$0x1]
        %v360 = vld [vmem:[#allocation3] sm:$0x1]
        %v361 = vlaneseq
        %v362 = vand.u32 %v361, 127
        %v363 = vcvt.s32.f32 %v362
        %v364 = vadd.f32 %v363, 1.0
        %v365 = vmul.f32 %v350, 6.25e-05
        %v366 = vmul.f32 %v351, 6.25e-05
        %v367 = vmul.f32 %v352, 6.25e-05
        %369 = vset.pattern.permute.xlu0 0
        %370 = vperm.xlu0 %369, %v365
        %v371 = vpop.permute.xlu0 %370
        %374 = vset.pattern.permute.xlu0 0
        %375 = vperm.xlu0 %374, %v366
        %v376 = vpop.permute.xlu0 %375
        %379 = vset.pattern.permute.xlu0 0
        %380 = vperm.xlu0 %379, %v367
        %v381 = vpop.permute.xlu0 %380
        %v383 = vmul.f32 %v371, %v364
        %v384 = vmul.f32 %v376, %v364
        %v385 = vmul.f32 %v381, %v364
        %387 = vset.pattern.permute.xlu0 0
        %388 = vperm.xlu0 %387, %v353
        %v389 = vpop.permute.xlu0 %388
        %392 = vset.pattern.permute.xlu0 0
        %393 = vperm.xlu0 %392, %v354
        %v394 = vpop.permute.xlu0 %393
        %397 = vset.pattern.permute.xlu0 0
        %398 = vperm.xlu0 %397, %v355
        %v399 = vpop.permute.xlu0 %398
        %v401 = vadd.f32 %v383, %v389
        %v402 = vadd.f32 %v384, %v394
        %v403 = vadd.f32 %v385, %v399
        %v404 = vfloor.f32 %v401
        %v405 = vfloor.f32 %v402
        %v406 = vfloor.f32 %v403
        %v407 = vsub.f32 %v401, %v404
        %v408 = vsub.f32 %v402, %v405
        %v409 = vsub.f32 %v403, %v406
        %v410 = vmul.f32 %v407, 6.2831855
        %v411 = vmul.f32 %v408, 6.2831855
        %v412 = vmul.f32 %v409, 6.2831855
        %v413 = vand.u32 2147483647, %v410
        %vm414 = vcmp.le.f32.partialorder %v413, 0.7853982
        %vm415 = vcmp.lt.s32.totalorder %v410, 0
        %v416 = vand.u32 %v410, 2139095040
        %v417 = vshrl.u32 %v416, 23
        %v418 = vsub.s32 %v417, 127
        %v419 = vand.u32 2147483647, %v410
        %v420 = vand.u32 %v419, 8388607
        %v421 = vor.u32 %v420, 8388608
        %v422 = vsub.s32 0, %v421
        %v423 = vadd.s32 %v418, 1
        %vm424 = vcmp.gt.s32.totalorder %v423, 0
        %v425 = vsel %vm424, %v423, 0
        %v426 = vshrl.u32 %v425, 5
        %v427 = vand.u32 %v425, 31
        %v428 = vsub.s32 32, %v427
        %v429 = vshrl.u32 683565275, %v428
        %v430 = vshll.u32 683565275, %v427
        %v431 = vshrl.u32 2475754826, %v428
        %v432 = vor.u32 %v430, %v431
        %v433 = vshll.u32 2475754826, %v427
        %v434 = vshrl.u32 2131351028, %v428
        %v435 = vor.u32 %v433, %v434
        %v436 = vshll.u32 2131351028, %v427
        %v437 = vshrl.u32 2102212464, %v428
        %v438 = vor.u32 %v436, %v437
        %v439 = vshll.u32 2102212464, %v427
        %v440 = vshrl.u32 920167782, %v428
        %v441 = vor.u32 %v439, %v440
        %v442 = vshll.u32 920167782, %v427
        %v443 = vshrl.u32 1326507024, %v428
        %v444 = vor.u32 %v442, %v443
        %vm445 = vcmp.lt.s32.totalorder %v426, 1
        %vm446 = vcmp.lt.s32.totalorder %v426, 2
        %vm447 = vcmp.lt.s32.totalorder %v426, 3
        %vm448 = vcmp.lt.s32.totalorder %v426, 4
        %v449 = vsel %vm445, %v429, %v432
        %v450 = vsel %vm448, %v438, 2102212464
        %v451 = vsel %vm447, %v435, %v450
        %v452 = vsel %vm446, %v449, %v451
        %v453 = vsel %vm445, %v432, %v435
        %v454 = vsel %vm448, %v441, 920167782
        %v455 = vsel %vm447, %v438, %v454
        %v456 = vsel %vm446, %v453, %v455
        %v457 = vsel %vm445, %v435, %v438
        %v458 = vsel %vm448, %v444, 1326507024
        %v459 = vsel %vm447, %v441, %v458
        %v460 = vsel %vm446, %v457, %v459
        %v461 = vshll.u32 %v421, 8
        %v462 = vmul.u32.u64.compose %v461, %v460
        %v463 = vextract.low.u32 %v462
        %v464 = vextract.high.u32 %v462
        %v465 = vmul.u32.u64.compose %v461, %v456
        %v466 = vextract.low.u32 %v465
        %v467 = vextract.high.u32 %v465
        %v468 = vmul.u32 %v461, %v452
        %v469 = vadd.s32 %v464, %v466
        %vm470 = vc.u32 %v464, %v466
        %v471 = vadd.s32 %v467, 1
        %v472 = vsel %vm470, %v471, %v467
        %v473 = vadd.s32 %v468, %v472
        %v474 = vadd.s32 %v473, 536870912
        %v475 = vshrl.u32 %v474, 30
        %v476 = vshll.u32 %v475, 30
        %v477 = vsub.s32 %v473, %v476
        %vm478 = vcmp.lt.s32.totalorder %v477, 0
        %v479 = vsub.s32 0, %v477
        %v480 = vsel %vm478, %v479, %v477
        %v481 = vclz %v480
        %v482 = vsub.s32 %v481, 2
        %vm483 = vcmp.gt.s32.totalorder 0, %v482
        %v484 = vsel %vm483, 0, %v482
        %v485 = vsub.s32 32, %v484
        %v486 = vshll.u32 %v477, %v484
        %v487 = vshrl.u32 %v469, %v485
        %v488 = vor.u32 %v486, %v487
        %v489 = vsub.s32 4294967266, %v484
        %v490 = vadd.s32 %v489, 127
        %v491 = vshll.u32 %v490, 23
        %v492 = vor.u32 4788187, %v491
        %v493 = vand.u32 2147483647, %v492
        %v495 = vcvt.s32.f32 %v488
        %v496 = vmul.f32 %v495, %v493
        %v497 = vxor.u32 %v496, 2147483648
        %v498 = vsel %vm415, %v497, %v496
        %v499 = vsub.s32 4, %v475
        %v500 = vsel %vm415, %v499, %v475
        %v501 = vsel %vm414, %v410, %v498
        %v502 = vsel %vm414, 0, %v500
        %v503 = vcosq.f32.pop %v501
        %v504 = vsinq.f32.pop %v501
        %vm505 = vweird.f32 %v410
        %v506 = vadd.s32 %v502, 3
        %v507 = vand.u32 %v506, 3
        %vm508 = vcmp.lt.s32.totalorder %v507, 2
        %vm509 = vcmp.eq.s32.totalorder %v507, 0
        %v510 = vxor.u32 %v504, 2147483648
        %v511 = vsel %vm509, %v503, %v510
        %vm512 = vcmp.eq.s32.totalorder %v507, 2
        %v513 = vxor.u32 %v503, 2147483648
        %v514 = vsel %vm512, %v513, %v504
        %v515 = vsel %vm508, %v511, %v514
        %v516 = vsel %vm505, nan, %v515
        %v517 = vand.u32 2147483647, %v411
        %vm518 = vcmp.le.f32.partialorder %v517, 0.7853982
        %vm519 = vcmp.lt.s32.totalorder %v411, 0
        %v520 = vand.u32 %v411, 2139095040
        %v521 = vshrl.u32 %v520, 23
        %v522 = vsub.s32 %v521, 127
        %v523 = vand.u32 2147483647, %v411
        %v524 = vand.u32 %v523, 8388607
        %v525 = vor.u32 %v524, 8388608
        %v526 = vsub.s32 0, %v525
        %v527 = vadd.s32 %v522, 1
        %vm528 = vcmp.gt.s32.totalorder %v527, 0
        %v529 = vsel %vm528, %v527, 0
        %v530 = vshrl.u32 %v529, 5
        %v531 = vand.u32 %v529, 31
        %v532 = vsub.s32 32, %v531
        %v533 = vshrl.u32 683565275, %v532
        %v534 = vshll.u32 683565275, %v531
        %v535 = vshrl.u32 2475754826, %v532
        %v536 = vor.u32 %v534, %v535
        %v537 = vshll.u32 2475754826, %v531
        %v538 = vshrl.u32 2131351028, %v532
        %v539 = vor.u32 %v537, %v538
        %v540 = vshll.u32 2131351028, %v531
        %v541 = vshrl.u32 2102212464, %v532
        %v542 = vor.u32 %v540, %v541
        %v543 = vshll.u32 2102212464, %v531
        %v544 = vshrl.u32 920167782, %v532
        %v545 = vor.u32 %v543, %v544
        %v546 = vshll.u32 920167782, %v531
        %v547 = vshrl.u32 1326507024, %v532
        %v548 = vor.u32 %v546, %v547
        %vm549 = vcmp.lt.s32.totalorder %v530, 1
        %vm550 = vcmp.lt.s32.totalorder %v530, 2
        %vm551 = vcmp.lt.s32.totalorder %v530, 3
        %vm552 = vcmp.lt.s32.totalorder %v530, 4
        %v553 = vsel %vm549, %v533, %v536
        %v554 = vsel %vm552, %v542, 2102212464
        %v555 = vsel %vm551, %v539, %v554
        %v556 = vsel %vm550, %v553, %v555
        %v557 = vsel %vm549, %v536, %v539
        %v558 = vsel %vm552, %v545, 920167782
        %v559 = vsel %vm551, %v542, %v558
        %v560 = vsel %vm550, %v557, %v559
        %v561 = vsel %vm549, %v539, %v542
        %v562 = vsel %vm552, %v548, 1326507024
        %v563 = vsel %vm551, %v545, %v562
        %v564 = vsel %vm550, %v561, %v563
        %v565 = vshll.u32 %v525, 8
        %v566 = vmul.u32.u64.compose %v565, %v564
        %v567 = vextract.low.u32 %v566
        %v568 = vextract.high.u32 %v566
        %v569 = vmul.u32.u64.compose %v565, %v560
        %v570 = vextract.low.u32 %v569
        %v571 = vextract.high.u32 %v569
        %v572 = vmul.u32 %v565, %v556
        %v573 = vadd.s32 %v568, %v570
        %vm574 = vc.u32 %v568, %v570
        %v575 = vadd.s32 %v571, 1
        %v576 = vsel %vm574, %v575, %v571
        %v577 = vadd.s32 %v572, %v576
        %v578 = vadd.s32 %v577, 536870912
        %v579 = vshrl.u32 %v578, 30
        %v580 = vshll.u32 %v579, 30
        %v581 = vsub.s32 %v577, %v580
        %vm582 = vcmp.lt.s32.totalorder %v581, 0
        %v583 = vsub.s32 0, %v581
        %v584 = vsel %vm582, %v583, %v581
        %v585 = vclz %v584
        %v586 = vsub.s32 %v585, 2
        %vm587 = vcmp.gt.s32.totalorder 0, %v586
        %v588 = vsel %vm587, 0, %v586
        %v589 = vsub.s32 32, %v588
        %v590 = vshll.u32 %v581, %v588
        %v591 = vshrl.u32 %v573, %v589
        %v592 = vor.u32 %v590, %v591
        %v593 = vsub.s32 4294967266, %v588
        %v594 = vadd.s32 %v593, 127
        %v595 = vshll.u32 %v594, 23
        %v596 = vor.u32 4788187, %v595
        %v597 = vand.u32 2147483647, %v596
        %v599 = vcvt.s32.f32 %v592
        %v600 = vmul.f32 %v599, %v597
        %v601 = vxor.u32 %v600, 2147483648
        %v602 = vsel %vm519, %v601, %v600
        %v603 = vsub.s32 4, %v579
        %v604 = vsel %vm519, %v603, %v579
        %v605 = vsel %vm518, %v411, %v602
        %v606 = vsel %vm518, 0, %v604
        %v607 = vcosq.f32.pop %v605
        %v608 = vsinq.f32.pop %v605
        %vm609 = vweird.f32 %v411
        %v610 = vadd.s32 %v606, 3
        %v611 = vand.u32 %v610, 3
        %vm612 = vcmp.lt.s32.totalorder %v611, 2
        %vm613 = vcmp.eq.s32.totalorder %v611, 0
        %v614 = vxor.u32 %v608, 2147483648
        %v615 = vsel %vm613, %v607, %v614
        %vm616 = vcmp.eq.s32.totalorder %v611, 2
        %v617 = vxor.u32 %v607, 2147483648
        %v618 = vsel %vm616, %v617, %v608
        %v619 = vsel %vm612, %v615, %v618
        %v620 = vsel %vm609, nan, %v619
        %v621 = vand.u32 2147483647, %v412
        %vm622 = vcmp.le.f32.partialorder %v621, 0.7853982
        %vm623 = vcmp.lt.s32.totalorder %v412, 0
        %v624 = vand.u32 %v412, 2139095040
        %v625 = vshrl.u32 %v624, 23
        %v626 = vsub.s32 %v625, 127
        %v627 = vand.u32 2147483647, %v412
        %v628 = vand.u32 %v627, 8388607
        %v629 = vor.u32 %v628, 8388608
        %v630 = vsub.s32 0, %v629
        %v631 = vadd.s32 %v626, 1
        %vm632 = vcmp.gt.s32.totalorder %v631, 0
        %v633 = vsel %vm632, %v631, 0
        %v634 = vshrl.u32 %v633, 5
        %v635 = vand.u32 %v633, 31
        %v636 = vsub.s32 32, %v635
        %v637 = vshrl.u32 683565275, %v636
        %v638 = vshll.u32 683565275, %v635
        %v639 = vshrl.u32 2475754826, %v636
        %v640 = vor.u32 %v638, %v639
        %v641 = vshll.u32 2475754826, %v635
        %v642 = vshrl.u32 2131351028, %v636
        %v643 = vor.u32 %v641, %v642
        %v644 = vshll.u32 2131351028, %v635
        %v645 = vshrl.u32 2102212464, %v636
        %v646 = vor.u32 %v644, %v645
        %v647 = vshll.u32 2102212464, %v635
        %v648 = vshrl.u32 920167782, %v636
        %v649 = vor.u32 %v647, %v648
        %v650 = vshll.u32 920167782, %v635
        %v651 = vshrl.u32 1326507024, %v636
        %v652 = vor.u32 %v650, %v651
        %vm653 = vcmp.lt.s32.totalorder %v634, 1
        %vm654 = vcmp.lt.s32.totalorder %v634, 2
        %vm655 = vcmp.lt.s32.totalorder %v634, 3
        %vm656 = vcmp.lt.s32.totalorder %v634, 4
        %v657 = vsel %vm653, %v637, %v640
        %v658 = vsel %vm656, %v646, 2102212464
        %v659 = vsel %vm655, %v643, %v658
        %v660 = vsel %vm654, %v657, %v659
        %v661 = vsel %vm653, %v640, %v643
        %v662 = vsel %vm656, %v649, 920167782
        %v663 = vsel %vm655, %v646, %v662
        %v664 = vsel %vm654, %v661, %v663
        %v665 = vsel %vm653, %v643, %v646
        %v666 = vsel %vm656, %v652, 1326507024
        %v667 = vsel %vm655, %v649, %v666
        %v668 = vsel %vm654, %v665, %v667
        %v669 = vshll.u32 %v629, 8
        %v670 = vmul.u32.u64.compose %v669, %v668
        %v671 = vextract.low.u32 %v670
        %v672 = vextract.high.u32 %v670
        %v673 = vmul.u32.u64.compose %v669, %v664
        %v674 = vextract.low.u32 %v673
        %v675 = vextract.high.u32 %v673
        %v676 = vmul.u32 %v669, %v660
        %v677 = vadd.s32 %v672, %v674
        %vm678 = vc.u32 %v672, %v674
        %v679 = vadd.s32 %v675, 1
        %v680 = vsel %vm678, %v679, %v675
        %v681 = vadd.s32 %v676, %v680
        %v682 = vadd.s32 %v681, 536870912
        %v683 = vshrl.u32 %v682, 30
        %v684 = vshll.u32 %v683, 30
        %v685 = vsub.s32 %v681, %v684
        %vm686 = vcmp.lt.s32.totalorder %v685, 0
        %v687 = vsub.s32 0, %v685
        %v688 = vsel %vm686, %v687, %v685
        %v689 = vclz %v688
        %v690 = vsub.s32 %v689, 2
        %vm691 = vcmp.gt.s32.totalorder 0, %v690
        %v692 = vsel %vm691, 0, %v690
        %v693 = vsub.s32 32, %v692
        %v694 = vshll.u32 %v685, %v692
        %v695 = vshrl.u32 %v677, %v693
        %v696 = vor.u32 %v694, %v695
        %v697 = vsub.s32 4294967266, %v692
        %v698 = vadd.s32 %v697, 127
        %v699 = vshll.u32 %v698, 23
        %v700 = vor.u32 4788187, %v699
        %v701 = vand.u32 2147483647, %v700
        %v703 = vcvt.s32.f32 %v696
        %v704 = vmul.f32 %v703, %v701
        %v705 = vxor.u32 %v704, 2147483648
        %v706 = vsel %vm623, %v705, %v704
        %v707 = vsub.s32 4, %v683
        %v708 = vsel %vm623, %v707, %v683
        %v709 = vsel %vm622, %v412, %v706
        %v710 = vsel %vm622, 0, %v708
        %v711 = vcosq.f32.pop %v709
        %v712 = vsinq.f32.pop %v709
        %vm713 = vweird.f32 %v412
        %v714 = vadd.s32 %v710, 3
        %v715 = vand.u32 %v714, 3
        %vm716 = vcmp.lt.s32.totalorder %v715, 2
        %vm717 = vcmp.eq.s32.totalorder %v715, 0
        %v718 = vxor.u32 %v712, 2147483648
        %v719 = vsel %vm717, %v711, %v718
        %vm720 = vcmp.eq.s32.totalorder %v715, 2
        %v721 = vxor.u32 %v711, 2147483648
        %v722 = vsel %vm720, %v721, %v712
        %v723 = vsel %vm716, %v719, %v722
        %v724 = vsel %vm713, nan, %v723
        %v725 = vmul.f32 %v516, 0.1
        %v726 = vmul.f32 %v620, 0.1
        %v727 = vmul.f32 %v724, 0.1
        %vm728 = vcmp.gt.f32.partialorder %v350, 0.0
        %vm729 = vcmp.gt.f32.partialorder %v351, 0.0
        %vm730 = vcmp.gt.f32.partialorder %v352, 0.0
        %v731 = vsel %vm728, 1, 0
        %v732 = vsel %vm729, 1, 0
        %v733 = vsel %vm730, 1, 0
        %v734 = vcvt.s32.f32 %v731
        %v735 = vcvt.s32.f32 %v732
        %v736 = vcvt.s32.f32 %v733
        %738 = vset.pattern.permute.xlu0 0
        %739 = vperm.xlu0 %738, %v734
        %v740 = vpop.permute.xlu0 %739
        %743 = vset.pattern.permute.xlu0 0
        %744 = vperm.xlu0 %743, %v735
        %v745 = vpop.permute.xlu0 %744
        %748 = vset.pattern.permute.xlu0 0
        %749 = vperm.xlu0 %748, %v736
        %v750 = vpop.permute.xlu0 %749
        %v752 = vmul.f32 %v725, %v740
        %v753 = vmul.f32 %v726, %v745
        %v754 = vmul.f32 %v727, %v750
        %v755 = vmul.f32 %v734, 0.003
        %v756 = vmul.f32 %v735, 0.003
        %v757 = vmul.f32 %v736, 0.003
        %v758 = vsub.f32 1.0, %v734
        %v759 = vsub.f32 1.0, %v735
        %v760 = vsub.f32 1.0, %v736
        %v761 = vmul.f32 %v758, 0.033333335
        %v762 = vmul.f32 %v759, 0.033333335
        %v763 = vmul.f32 %v760, 0.033333335
        %v764 = vadd.f32 %v755, %v761
        %v765 = vadd.f32 %v756, %v762
        %v766 = vadd.f32 %v757, %v763
        %768 = vset.pattern.permute.xlu0 0
        %769 = vperm.xlu0 %768, %v764
        %v770 = vpop.permute.xlu0 %769
        %773 = vset.pattern.permute.xlu0 0
        %774 = vperm.xlu0 %773, %v765
        %v775 = vpop.permute.xlu0 %774
        %778 = vset.pattern.permute.xlu0 0
        %779 = vperm.xlu0 %778, %v766
        %v780 = vpop.permute.xlu0 %779
        %v782 = vmul.f32 %v770, %v356
        %v783 = vmul.f32 %v775, %v357
        %v784 = vmul.f32 %v780, %v358
        %v785 = vadd.f32 %v752, %v782
        %v786 = vadd.f32 %v753, %v783
        %v787 = vadd.f32 %v754, %v784
        %v789 = vlaneseq
        %v790 = vshrl.u32 %v789, 7
        %v791 = vsub.s32 0, %v790
        %v792 = vrot.slane %v359, %v791
        %793 = vset.pattern.permute.xlu0 0
        %794 = vperm.xlu0 %793, %v792
        %v795 = vpop.permute.xlu0 %794
        %v797 = vmul.f32 %v785, %v795
        %v798 = vmul.f32 %v786, %v795
        %v799 = vmul.f32 %v787, %v795
        %v801 = vlaneseq
        %v802 = vshrl.u32 %v801, 7
        %v803 = vsub.s32 0, %v802
        %v804 = vrot.slane %v360, %v803
        %805 = vset.pattern.permute.xlu0 0
        %806 = vperm.xlu0 %805, %v804
        %v807 = vpop.permute.xlu0 %806
        %v809 = vadd.f32 %v797, %v807
        %v810 = vadd.f32 %v798, %v807
        %v811 = vadd.f32 %v799, %v807
        %v812 = vtanh.pop %v809
        %v813 = vtanh.pop %v810
        %v814 = vtanh.pop %v811
        %vm815 = vcmask 31744
        %816 = vst.msk [vmem:[%s349] sm:$0xff] %vm815, %v812
        %817 = vst.msk [vmem:[%s349 + $0x8] sm:$0xff] %vm815, %v813
        %818 = vst.msk [vmem:[%s349 + $0x10] sm:$0xff] %vm815, %v814
        %s819 = sand.u32 %s177, 1
        %s820 = scalar_lea.sflag [#allocation6], %s819
        %s821 = sand.u32 %s177, 1
        %s822 = smul.addr %s821, 24
        %s823 = scalar_lea.vmem [#allocation10], %s822
        // Predicated region
        $region53: #{tpu_custom_call.1} parent=39 // pred_check
          %p824 = pneg %p187
        $region54: #{tpu_custom_call.1} parent=39 // pred_check_branch
          %826 = sbr.rel (%p824) target = $region56
        $region55: #{tpu_custom_call.1} parent=39 // pred_region
          %s828 = ssub.s32 384, 384
          %829 = vsyncadd %s820, %s828
          %s830 = smul.addr %s34, 3
          %s831 = smul.addr %s33, 3
          %s832 = sadd.s32 %s830, %s831
          %s833 = smul.addr %s832, 128
          %s834 = scalar_lea.hbm %s5, %s833
          %s835 = sshll.u32 %s823, 4
          %s836 = int_to_ptr.vmem [resolvable:$true] %s835
          %841 = dma.vmem_to_hbm [thread:$0]  %s836, 384, %s834, %s820, 128, 128, 8
        $region56: #{tpu_custom_call.1} parent=39 // pred_fallthru
          _
      $region40: #{tpu_custom_call.1} parent=5 // pred_fallthru
        _
      %p842 = scmp.le.s32.totalorder 2, %s24
      // Predicated region
      $region57: #{tpu_custom_call.1} parent=5 // pred_check
        %p843 = pneg %p842
      $region58: #{tpu_custom_call.1} parent=5 // pred_check_branch
        %845 = sbr.rel (%p843) target = $region60
      $region59: #{tpu_custom_call.1} parent=5 // pred_region
        %s846 = ssub.s32 %s24, 2
        // Predicated region
        $region61: #{tpu_custom_call.1} parent=59 // pred_check
          %p847 = pneg %p193
        $region62: #{tpu_custom_call.1} parent=59 // pred_check_branch
          %849 = sbr.rel (%p847) target = $region64
        $region63: #{tpu_custom_call.1} parent=59 // pred_region
          %s850 = sand.u32 %s178, 1
          %s851 = scalar_lea.sflag [#allocation6], %s850
          %s852 = sand.u32 %s178, 1
          %s853 = smul.addr %s852, 24
          %s854 = scalar_lea.vmem [#allocation10], %s853
          %855 = dma.done %s851, 384
        $region64: #{tpu_custom_call.1} parent=59 // pred_fallthru
          _
      $region60: #{tpu_custom_call.1} parent=5 // pred_fallthru
        _
    $region6: #{tpu_custom_call.1} parent=1 // loop_footer
      %s28 = sadd.s32 1, %s24
    $region7: #{tpu_custom_call.1} parent=1 // loop_footer_branch
      %23 = sbr.rel target = $region3
    $region8: #{tpu_custom_call.1} parent=1 // loop_exit
      _
    %856 = vsyncpa [#allocation5], 1
    %s857 = scalar_lea.sflag [#allocation5], 1
    %858 = vsyncpa %s857, 1
    %859 = vsyncpa [#allocation8], 1
    %s860 = scalar_lea.sflag [#allocation8], 1
    %861 = vsyncpa %s860, 1
    %862 = vsyncpa [#allocation6], 1
    %s863 = scalar_lea.sflag [#allocation6], 1
    %864 = vsyncpa %s863, 1

</llo_original>
